<compile_context>
chip_gen: v7x
topology: tpu7x:2x2x1
jax: 0.10.0
libtpu: 0.0.40
codegen_flags: <defaults>
</compile_context>

<pallas_src>
import math
import numpy as np
import jax
import jax.numpy as jnp
from jax import lax
from jax.experimental import pallas as pl
from jax.experimental.pallas import tpu as pltpu

LANE = 128
VMEM_LIMIT = 64 * 1024 * 1024


def _round_up(x, m):
    return ((x + m - 1) // m) * m


# ----------------------------------------------------------------------------
# Kernel 1: fused graph pipeline
#   span-merge -> GCN layer 1 -> GCN layer 2 -> entity-bank projection
# intermediates stay in vregs/VMEM; only the (bf16) entity bank goes to HBM.
# Each of the three Dp-wide feature slabs is written to a 128-aligned static
# column slice of the output (no lane-axis concat through the XLU).
# ----------------------------------------------------------------------------

def fused_graph_pipeline(span, enc, adj_norm, sel, gcn_w1, gcn_b1, gcn_w2, gcn_b2):
    """span [B,N,S] bf16, enc [B,S,Dp] bf16, adj_norm [B,N,N] bf16, sel [B,E,N] bf16,
    gcn_w* [Dp,Dp] bf16, gcn_b* [1,Dp] f32.  Returns entity_bank [B, E, 3*Dp] bf16."""
    B, N, S = span.shape
    Dp = enc.shape[-1]
    E = sel.shape[1]
    bank = 3 * Dp

    def _graph_kernel(span_ref, enc_ref, adj_ref, sel_ref,
                      w1_ref, b1_ref, w2_ref, b2_ref, ebank_ref):
        adj = adj_ref[0]                                                     # [N, N] bf16
        selm = sel_ref[0]                                                    # [E, N] bf16
        # mergy_span_token stand-in: span-average of token features
        gf0 = jnp.dot(span_ref[0], enc_ref[0],
                      preferred_element_type=jnp.float32)                    # [N, Dp] f32
        gf0_bf = gf0.astype(jnp.bfloat16)                                    # cast once
        # GCN layer 1:  ReLU(adj_norm @ (H @ W1) + b1)
        hw1 = jnp.dot(gf0_bf, w1_ref[...], preferred_element_type=jnp.float32)
        h1 = jnp.maximum(
            jnp.dot(adj, hw1.astype(jnp.bfloat16),
                    preferred_element_type=jnp.float32) + b1_ref[...], 0.0)
        h1_bf = h1.astype(jnp.bfloat16)
        # GCN layer 2
        hw2 = jnp.dot(h1_bf, w2_ref[...], preferred_element_type=jnp.float32)
        h2 = jnp.maximum(
            jnp.dot(adj, hw2.astype(jnp.bfloat16),
                    preferred_element_type=jnp.float32) + b2_ref[...], 0.0)
        h2_bf = h2.astype(jnp.bfloat16)
        # GraphReasonLayer concat + mention->entity averaging:
        #   sel @ concat(A,B,C) == concat(sel@A, sel@B, sel@C)  -> 3 column slabs
        ebank_ref[0, :, 0:Dp] = jnp.dot(
            selm, gf0_bf, preferred_element_type=jnp.float32).astype(jnp.bfloat16)
        ebank_ref[0, :, Dp:2 * Dp] = jnp.dot(
            selm, h1_bf, preferred_element_type=jnp.float32).astype(jnp.bfloat16)
        ebank_ref[0, :, 2 * Dp:3 * Dp] = jnp.dot(
            selm, h2_bf, preferred_element_type=jnp.float32).astype(jnp.bfloat16)

    flops = 2 * B * (N * S * Dp + 2 * N * Dp * Dp + 2 * N * N * Dp + 3 * E * N * Dp)
    bytes_accessed = 2 * B * (N * S + S * Dp + N * N + E * N + E * bank) \
        + 2 * 2 * Dp * Dp + 4 * 2 * Dp
    return pl.pallas_call(
        _graph_kernel,
        out_shape=jax.ShapeDtypeStruct((B, E, bank), jnp.bfloat16),
        grid=(B,),
        in_specs=[pl.BlockSpec((1, N, S), lambda i: (i, 0, 0)),
                  pl.BlockSpec((1, S, Dp), lambda i: (i, 0, 0)),
                  pl.BlockSpec((1, N, N), lambda i: (i, 0, 0)),
                  pl.BlockSpec((1, E, N), lambda i: (i, 0, 0)),
                  pl.BlockSpec((Dp, Dp), lambda i: (0, 0)),
                  pl.BlockSpec((1, Dp), lambda i: (0, 0)),
                  pl.BlockSpec((Dp, Dp), lambda i: (0, 0)),
                  pl.BlockSpec((1, Dp), lambda i: (0, 0))],
        out_specs=pl.BlockSpec((1, E, bank), lambda i: (i, 0, 0)),
        compiler_params=pltpu.CompilerParams(
            dimension_semantics=("parallel",), vmem_limit_bytes=VMEM_LIMIT),
        cost_estimate=pl.CostEstimate(flops=int(flops), transcendentals=0,
                                      bytes_accessed=int(bytes_accessed)),
    )(span, enc, adj_norm, sel, gcn_w1, gcn_b1, gcn_w2, gcn_b2)


# ----------------------------------------------------------------------------
# Kernel 2: single-head context self-attention
#   W_qkv [3, Dp, Dp] (leading-axis indexed), scale folded into Wq at init,
#   key mask rebuilt in-kernel from src_lengths (SMEM prefetch), q.k^T via
#   dot_general contracting on last dims (no XLU transpose), bf16 output.
# ----------------------------------------------------------------------------

def context_attention(x_bf, src_lengths, wqkv, wo):
    """x_bf [B,S,Dp] bf16, src_lengths [B] int32, wqkv [3,Dp,Dp] bf16 (Wq pre-scaled),
    wo [Dp,Dp] bf16.  Returns [B, S, Dp] bf16."""
    B, S, Dp = x_bf.shape

    def _attn_kernel(lens_ref, x_ref, wqkv_ref, wo_ref, o_ref):
        L = lens_ref[pl.program_id(0)]                                       # scalar (SMEM)
        xb = x_ref[0]                                                        # [S, Dp] bf16
        q = jnp.dot(xb, wqkv_ref[0],
                    preferred_element_type=jnp.float32).astype(jnp.bfloat16)  # scaled at init
        k = jnp.dot(xb, wqkv_ref[1],
                    preferred_element_type=jnp.float32).astype(jnp.bfloat16)
        v = jnp.dot(xb, wqkv_ref[2],
                    preferred_element_type=jnp.float32).astype(jnp.bfloat16)
        # contract over last dims -> no explicit K transpose
        s = lax.dot_general(q, k, (((1,), (1,)), ((), ())),
                            preferred_element_type=jnp.float32)               # [S, S] f32
        key_pos = lax.broadcasted_iota(jnp.int32, (S, S), 1)
        s = jnp.where(key_pos < L, s, -1e9)                                   # key-only mask
        s = s - jnp.max(s, axis=-1, keepdims=True)
        p = jnp.exp(s)
        p = p * pl.reciprocal(jnp.sum(p, axis=-1, keepdims=True), approx=True)
        ctx = jnp.dot(p.astype(jnp.bfloat16), v, preferred_element_type=jnp.float32)
        o_ref[0] = jnp.dot(ctx.astype(jnp.bfloat16), wo_ref[...],
                           preferred_element_type=jnp.float32).astype(jnp.bfloat16)

    flops = 2 * B * (4 * S * Dp * Dp + 2 * S * S * Dp)
    bytes_accessed = 2 * B * S * Dp * 2 + 2 * (3 * Dp * Dp + Dp * Dp) + 4 * B
    grid_spec = pltpu.PrefetchScalarGridSpec(
        num_scalar_prefetch=1,
        grid=(B,),
        in_specs=[pl.BlockSpec((1, S, Dp), lambda b, lens: (b, 0, 0)),
                  pl.BlockSpec((3, Dp, Dp), lambda b, lens: (0, 0, 0)),
                  pl.BlockSpec((Dp, Dp), lambda b, lens: (0, 0))],
        out_specs=pl.BlockSpec((1, S, Dp), lambda b, lens: (b, 0, 0)),
    )
    return pl.pallas_call(
        _attn_kernel,
        out_shape=jax.ShapeDtypeStruct((B, S, Dp), jnp.bfloat16),
        grid_spec=grid_spec,
        compiler_params=pltpu.CompilerParams(
            dimension_semantics=("parallel",), vmem_limit_bytes=VMEM_LIMIT),
        cost_estimate=pl.CostEstimate(flops=int(flops), transcendentals=int(B * S * S),
                                      bytes_accessed=int(bytes_accessed)),
    )(src_lengths, x_bf, wqkv, wo)


# ----------------------------------------------------------------------------
# Kernel 3: predict MLP head fused with masked max/argmax over the path axis.
#   hidden = ReLU(pair_fea @ W1_pair + ctx_at[k] @ W1_ctx + b1); sc = hidden @ W2 + b2
#   * W1 split by feature group: the per-pair term is computed once per H-tile.
#   * H (the hidden/contraction axis of Linear#2) is grid-tiled ("arbitrary") with a
#     [K, TG, Rp] f32 scratch accumulator (ReLU is elementwise, Linear#2 contracts
#     over H, so per-H-tile partial sums add exactly).
#   * path mask applied as a precomputed additive bias at finalize.
#   * output width padded to Rp=128 -> lane-dense [TG, 128] slabs.
# ----------------------------------------------------------------------------

def predict_head(pair_fea, ctx_at_k, path_bias_k, w1p, w1c, b1, w2, b2, tg, th):
    """pair_fea [Gp,Cp] bf16, ctx_at_k [K,Gp,Dp] bf16, path_bias_k [K,Gp,1] f32 (0 / -1e9),
    w1p [Cp,H] bf16, w1c [Dp,H] bf16, b1 [1,H] f32, w2 [H,Rp] bf16, b2 [1,Rp] f32.
    Returns (predictions [Gp,Rp] f32, task_select [Gp,Rp] int32)."""
    Gp, Cp = pair_fea.shape
    K, _, Dp = ctx_at_k.shape
    H = w1p.shape[1]
    Rp = w2.shape[1]
    assert Gp % tg == 0 and H % th == 0

    def _pred_kernel(pair_ref, ctx_ref, bias_ref, w1p_ref, w1c_ref, b1_ref,
                     w2_ref, b2_ref, pred_ref, sel_ref, acc_ref):
        hj = pl.program_id(1)

        @pl.when(hj == 0)
        def _():
            acc_ref[...] = jnp.zeros_like(acc_ref)

        # per-pair part of Linear #1 for this H-tile (computed once per pair, not per K)
        pair_term = jnp.dot(pair_ref[...], w1p_ref[...],
                            preferred_element_type=jnp.float32) + b1_ref[...]   # [TG, TH]
        for k in range(K):                                       # K is small & static
            ctx_term = jnp.dot(ctx_ref[k], w1c_ref[...],
                               preferred_element_type=jnp.float32)              # [TG, TH]
            h = jnp.maximum(pair_term + ctx_term, 0.0).astype(jnp.bfloat16)     # ReLU (+Dropout=id)
            acc_ref[k] += jnp.dot(h, w2_ref[...],
                                  preferred_element_type=jnp.float32)           # [TG, Rp]

        @pl.when(hj == pl.num_programs(1) - 1)
        def _():
            # masked_fill via additive bias, then max/argmax over the path axis
            best = acc_ref[0] + b2_ref[...] + bias_ref[0]
            best_idx = jnp.zeros(best.shape, dtype=jnp.int32)
            for k in range(1, K):
                sc = acc_ref[k] + b2_ref[...] + bias_ref[k]
                upd = sc > best                                  # strict > == first-max index
                best = jnp.where(upd, sc, best)
                best_idx = jnp.where(upd, k, best_idx)
            pred_ref[...] = best                                 # lane-dense [TG, Rp] slab
            sel_ref[...] = best_idx

    flops = 2 * Gp * (Cp * H + K * Dp * H + K * H * Rp)
    bytes_accessed = 2 * (Gp * Cp + K * Gp * Dp + Cp * H + Dp * H + H * Rp) \
        + 4 * (K * Gp + H + Rp) + 8 * Gp * Rp
    return pl.pallas_call(
        _pred_kernel,
        out_shape=(jax.ShapeDtypeStruct((Gp, Rp), jnp.float32),
                   jax.ShapeDtypeStruct((Gp, Rp), jnp.int32)),
        grid=(Gp // tg, H // th),
        in_specs=[pl.BlockSpec((tg, Cp), lambda i, h: (i, 0)),
                  pl.BlockSpec((K, tg, Dp), lambda i, h: (0, i, 0)),
                  pl.BlockSpec((K, tg, 1), lambda i, h: (0, i, 0)),
                  pl.BlockSpec((Cp, th), lambda i, h: (0, h)),
                  pl.BlockSpec((Dp, th), lambda i, h: (0, h)),
                  pl.BlockSpec((1, th), lambda i, h: (0, h)),
                  pl.BlockSpec((th, Rp), lambda i, h: (h, 0)),
                  pl.BlockSpec((1, Rp), lambda i, h: (0, 0))],
        out_specs=(pl.BlockSpec((tg, Rp), lambda i, h: (i, 0)),
                   pl.BlockSpec((tg, Rp), lambda i, h: (i, 0))),
        scratch_shapes=[pltpu.VMEM((K, tg, Rp), jnp.float32)],
        compiler_params=pltpu.CompilerParams(
            dimension_semantics=("parallel", "arbitrary"), vmem_limit_bytes=VMEM_LIMIT),
        cost_estimate=pl.CostEstimate(flops=int(flops), transcendentals=0,
                                      bytes_accessed=int(bytes_accessed)),
    )(pair_fea, ctx_at_k, path_bias_k, w1p, w1c, b1, w2, b2)


# ----------------------------------------------------------------------------
# Model (glue in plain JAX; hot paths call the Pallas kernels above)
# ----------------------------------------------------------------------------

class Config:
    activation = 'relu'
    bert_hid_size = 32
    use_entity_type = True;  entity_type_size = 8;  entity_type_num = 5; entity_type_pad = 0
    use_entity_id = True;    entity_id_size = 8;    max_entity_num = 6;  entity_id_pad = 0
    use_sent_id = True;      sent_id_size = 16;     sent_id_pad = 0
    use_graph = True;        graph_type = 'gcn';    gcn_layers = 2;      graph_dropout = 0.0
    use_dis_embed = True;    use_context = True;    output_dropout = 0.0
    relation_nums = 16
    vocab_size = 100


def init_params(cfg, key, slen):
    D = cfg.bert_hid_size + cfg.entity_type_size + cfg.entity_id_size + cfg.sent_id_size  # 64
    Dp = _round_up(D, LANE)                       # lane-dense padded feature width (128)
    bank_p = Dp * (cfg.gcn_layers + 1)            # padded entity-bank width (384)
    hid = (D * (cfg.gcn_layers + 1)) * 2          # logical bank*2 (384, already 128-multiple)
    Cp = _round_up(2 * bank_p + Dp + 40, LANE)    # padded pair-feature width (936 -> 1024)
    R = cfg.relation_nums
    Rp = _round_up(R, LANE)                       # padded relation width (16 -> 128)

    ks = jax.random.split(key, 20)
    nrm = lambda k, s: 0.02 * jax.random.normal(k, s, dtype=jnp.float32)

    def pad2(w, rows, cols):
        out = jnp.zeros((rows, cols), jnp.float32)
        return out.at[:w.shape[0], :w.shape[1]].set(w)

    scale = 1.0 / math.sqrt(D)                    # fold 1/sqrt(d_k) into Wq
    wq = pad2(nrm(ks[10], (D, D)) * scale, Dp, Dp)
    wk = pad2(nrm(ks[11], (D, D)), Dp, Dp)
    wv = pad2(nrm(ks[12], (D, D)), Dp, Dp)

    p = {
        'word_emb': nrm(ks[0], (cfg.vocab_size, cfg.bert_hid_size)),
        'pos_emb': nrm(ks[1], (slen, cfg.bert_hid_size)),
        'ent_type_emb': nrm(ks[2], (cfg.entity_type_num, cfg.entity_type_size)).at[cfg.entity_type_pad].set(0.0),
        'ent_id_emb': nrm(ks[3], (cfg.max_entity_num + 1, cfg.entity_id_size)).at[cfg.entity_id_pad].set(0.0),
        'sent_id_emb': nrm(ks[4], (cfg.max_entity_num + 1, cfg.sent_id_size)).at[cfg.sent_id_pad].set(0.0),
        'dis_emb': nrm(ks[5], (20, 20)),
        # GCN weights: padded rows feed zero inputs, padded cols kept zero so padded
        # output lanes stay exactly zero through ReLU (logical D=64 model unchanged).
        'gcn_w': [pad2(nrm(ks[6], (D, D)), Dp, Dp).astype(jnp.bfloat16),
                  pad2(nrm(ks[7], (D, D)), Dp, Dp).astype(jnp.bfloat16)],
        'gcn_b': [pad2(nrm(ks[8], (1, D)), 1, Dp),
                  pad2(nrm(ks[9], (1, D)), 1, Dp)],
        'wqkv': jnp.stack([wq, wk, wv], 0).astype(jnp.bfloat16),   # [3, Dp, Dp]
        'wo': pad2(nrm(ks[13], (D, D)), Dp, Dp).astype(jnp.bfloat16),
        # predict = Linear(class_size, bank*2) split row-wise by feature group; rows
        # that line up with zero-padded input lanes contribute exactly zero, so they
        # may be initialized freely without changing the logical computation.
        'pred_w1_pair': nrm(ks[14], (Cp, hid)).astype(jnp.bfloat16),
        'pred_w1_ctx': nrm(ks[15], (Dp, hid)).astype(jnp.bfloat16),
        'pred_b1': nrm(ks[16], (1, hid)),
        'pred_w2': pad2(nrm(ks[17], (hid, R)), hid, Rp).astype(jnp.bfloat16),
        'pred_b2': pad2(nrm(ks[18], (1, R)), 1, Rp),
    }
    dims = {'D': D, 'Dp': Dp, 'bank_p': bank_p, 'hid': hid, 'Cp': Cp, 'R': R, 'Rp': Rp}
    return p, dims


def drn_bert_forward(cfg, params, dims, inputs):
    D, Dp, bank_p = dims['D'], dims['Dp'], dims['bank_p']
    hid, Cp, R = dims['hid'], dims['Cp'], dims['R']
    words = inputs['words']
    B, S = words.shape
    src_lengths = inputs['src_lengths'].astype(jnp.int32)

    # --- "BERT" encoder (deterministic synthetic stand-in) + extra token embeddings ---
    enc = params['word_emb'][words] + params['pos_emb'][jnp.arange(S)][None]
    enc = jnp.concatenate([enc,
                           params['ent_type_emb'][inputs['entity_type']],
                           params['ent_id_emb'][inputs['entity_id']],
                           params['sent_id_emb'][inputs['sentence_id']]], axis=-1)
    enc = jnp.pad(enc, ((0, 0), (0, 0), (0, Dp - D)))       # lane-dense zero padding
    enc_bf = enc.astype(jnp.bfloat16)

    # --- span-average selection matrix (mergy_span_token stand-in) ---
    node_num = inputs['graph_node_num']
    max_node = int(inputs['max_node'])
    ginfo = inputs['graph_info'][:, :max_node]
    node_valid = jnp.arange(max_node)[None, :] < node_num[:, None]
    starts, ends = ginfo[..., 0], ginfo[..., 1]
    t = jnp.arange(S)
    span = ((t[None, None, :] >= starts[..., None]) & (t[None, None, :] < ends[..., None])
            & node_valid[..., None]).astype(jnp.float32)
    span_len = jnp.sum(span, axis=-1, keepdims=True)
    span = jnp.where(span_len > 0, span / jnp.maximum(span_len, 1.0), span)

    # --- normalized adjacency for the GCN stand-in ---
    adj = (inputs['graph_adj'][:, :max_node, :max_node] > 0).astype(jnp.float32)
    nv = node_valid.astype(jnp.float32)
    adj = adj * nv[:, :, None] * nv[:, None, :] + jnp.eye(max_node)[None] * nv[:, :, None]
    deg = jnp.sum(adj, axis=-1, keepdims=True)
    adj_norm = adj / jnp.maximum(deg, 1.0)

    # --- mention -> entity averaging matrix ---
    ems = inputs['context_ems_info']
    e_num = jnp.sum((ems[..., 0] == 1).astype(jnp.int32), axis=-1)            # [B]
    E = int(inputs['entity_num'])
    types, entids = ginfo[..., 3], ginfo[..., 2]
    is_mention = (types == 2) & node_valid
    e_range = jnp.arange(E)
    sel = (entids[:, None, :] == e_range[None, :, None]) & is_mention[:, None, :]
    sel = sel & (e_range[None, :] < e_num[:, None])[..., None]
    sel = sel.astype(jnp.float32)
    cnt = jnp.sum(sel, axis=-1, keepdims=True)
    sel = jnp.where(cnt > 0, sel / jnp.maximum(cnt, 1.0), sel)

    # --- fused graph pipeline (single Pallas kernel) -> entity bank [B, E, bank_p] bf16 ---
    entity_bank = fused_graph_pipeline(
        span.astype(jnp.bfloat16), enc_bf, adj_norm.astype(jnp.bfloat16),
        sel.astype(jnp.bfloat16),
        params['gcn_w'][0], params['gcn_b'][0], params['gcn_w'][1], params['gcn_b'][1])

    # --- head/tail entity gather + distance embedding ---
    htp = inputs['h_t_pairs']
    b_ind = jnp.arange(B)[:, None]
    h_ent = entity_bank[b_ind, htp[..., 0]].astype(jnp.float32)               # [B, P, bank_p]
    t_ent = entity_bank[b_ind, htp[..., 1]].astype(jnp.float32)
    dis = params['dis_emb'][inputs['ht_pair_distance']]                       # [B, P, 20]

    # --- context self-attention (Pallas; key mask rebuilt in-kernel) ---
    context_feature = context_attention(enc_bf, src_lengths, params['wqkv'], params['wo'])

    key_valid = (jnp.arange(S)[None, :] < src_lengths[:, None]).astype(jnp.float32)
    ctx_pool = (jnp.sum(context_feature.astype(jnp.float32) * key_valid[..., None], axis=1)
                / src_lengths[:, None].astype(jnp.float32))                   # [B, Dp]

    # --- Task_Decompose stand-in: per-pair features + per-path ctx features ---
    rel_path = inputs['relation_path']                                        # [B, P, K]
    P, K = rel_path.shape[1], rel_path.shape[2]
    path_mask = rel_path >= 0
    ctx_at = context_feature[jnp.arange(B)[:, None, None], jnp.clip(rel_path, 0)]  # [B,P,K,Dp] bf16

    G = B * P
    pair_fea = jnp.concatenate(
        [h_ent, t_ent, jnp.broadcast_to(ctx_pool[:, None, :], (B, P, Dp)), dis, dis],
        axis=-1).reshape(G, -1)                                               # [G, 936]
    pair_fea = jnp.pad(pair_fea, ((0, 0), (0, Cp - pair_fea.shape[-1])))      # -> [G, Cp]
    ctx_at_k = jnp.transpose(ctx_at.reshape(G, K, Dp), (1, 0, 2))             # [K, G, Dp]
    # additive path-mask bias (replaces in-kernel compare+select)
    bias_k = jnp.where(path_mask, 0.0, -1e9).astype(jnp.float32)
    bias_k = jnp.transpose(bias_k.reshape(G, K), (1, 0))[..., None]           # [K, G, 1]

    TG = min(256, _round_up(G, 8))
    Gp = _round_up(G, TG)
    if Gp != G:
        pad = Gp - G
        pair_fea = jnp.pad(pair_fea, ((0, pad), (0, 0)))
        ctx_at_k = jnp.pad(ctx_at_k, ((0, 0), (0, pad), (0, 0)))
        bias_k = jnp.pad(bias_k, ((0, 0), (0, pad), (0, 0)))
    TH = 128 if hid % 128 == 0 else hid                                       # H-tiling (v7x VMEM)

    pred, sel_idx = predict_head(pair_fea.astype(jnp.bfloat16), ctx_at_k.astype(jnp.bfloat16),
                                 bias_k, params['pred_w1_pair'], params['pred_w1_ctx'],
                                 params['pred_b1'], params['pred_w2'], params['pred_b2'],
                                 TG, TH)
    predictions = pred[:G, :R].reshape(B, P, R)
    task_select = sel_idx[:G, :R].reshape(B, P, R)
    return {'predictions': predictions, 'task_select': task_select}


# ----------------------------------------------------------------------------
# Example run
# ----------------------------------------------------------------------------

if __name__ == "__main__":
    cfg = Config()
    B, S, P, K = 2, 16, 4, 3
    key = jax.random.PRNGKey(0)
    kp, kw, ke, ki, ks, ka, kh, kd, kr = jax.random.split(key, 9)

    params, dims = init_params(cfg, kp, S)

    src_lengths = jnp.array([16, 12], dtype=jnp.int32)
    tok_valid = (jnp.arange(S)[None, :] < src_lengths[:, None])
    words = jnp.where(tok_valid, jax.random.randint(kw, (B, S), 1, cfg.vocab_size), 0)
    mask = tok_valid.astype(jnp.int32)
    entity_type = jnp.where(tok_valid, jax.random.randint(ke, (B, S), 1, cfg.entity_type_num), 0)
    entity_id = jnp.where(tok_valid, jax.random.randint(ki, (B, S), 1, cfg.max_entity_num + 1), 0)
    sentence_id = jnp.where(tok_valid, jax.random.randint(ks, (B, S), 1, cfg.max_entity_num + 1), 0)

    # graph: sentence nodes (type 1) first, then mention nodes (type 2)
    graph_info_np = np.zeros((B, 10, 4), dtype=np.int32)
    graph_info_np[0, :8] = [[0, 6, 0, 1], [6, 11, 0, 1], [11, 16, 0, 1],
                            [1, 3, 0, 2], [4, 6, 1, 2], [7, 9, 0, 2],
                            [12, 14, 2, 2], [15, 16, 3, 2]]
    graph_info_np[1, :6] = [[0, 7, 0, 1], [7, 12, 0, 1],
                            [2, 4, 0, 2], [5, 7, 1, 2], [8, 10, 2, 2], [10, 12, 0, 2]]
    graph_info = jnp.array(graph_info_np)
    graph_node_num = jnp.array([8, 6], dtype=jnp.int32)
    graph_adj = jax.random.randint(ka, (B, 10, 10), 0, 5).astype(jnp.int32)

    context_ems_info = jnp.array([[1, 1, 1, 1, 0, 0],
                                  [1, 1, 1, 0, 0, 0]], dtype=jnp.int32)[..., None]
    h_t_pairs = jnp.array([[[0, 1], [1, 2], [2, 3], [3, 0]],
                           [[0, 1], [1, 2], [2, 0], [0, 2]]], dtype=jnp.int32)
    ht_pair_distance = jax.random.randint(kd, (B, P), 0, 20)
    relation_path = jax.random.randint(kr, (B, P, K), -1, S)
    relation_path = relation_path.at[..., 0].set(jnp.abs(relation_path[..., 0]))

    inputs = {
        'words': words, 'mask': mask, 'src_lengths': src_lengths,
        'entity_type': entity_type, 'entity_id': entity_id, 'sentence_id': sentence_id,
        'graph_adj': graph_adj, 'graph_info': graph_info, 'graph_node_num': graph_node_num,
        'max_node': int(np.max(np.array(graph_node_num))),
        'context_ems_info': context_ems_info,
        'entity_num': int(np.max(np.sum(np.array(context_ems_info)[..., 0] == 1, axis=-1))),
        'h_t_pairs': h_t_pairs, 'ht_pair_distance': ht_pair_distance,
        'relation_path': relation_path,
    }

    out = drn_bert_forward(cfg, params, dims, inputs)
    jax.block_until_ready(out['predictions'])
    jax.block_until_ready(out['task_select'])
    assert out['predictions'].shape == (B, P, cfg.relation_nums)
    assert out['task_select'].shape == (B, P, cfg.relation_nums)
    assert bool(jnp.all(jnp.isfinite(out['predictions'])))
    print("KERNEL_OK")
</pallas_src>

<mosaic_0001>
module attributes {stable_mosaic.version = 11 : i64} {
  func.func @_graph_kernel(%arg0: i32, %arg1: memref<1x8x16xbf16, #tpu.memory_space<vmem>>, %arg2: memref<1x16x128xbf16, #tpu.memory_space<vmem>>, %arg3: memref<1x8x8xbf16, #tpu.memory_space<vmem>>, %arg4: memref<1x4x8xbf16, #tpu.memory_space<vmem>>, %arg5: memref<128x128xbf16, #tpu.memory_space<vmem>>, %arg6: memref<1x128xf32, #tpu.memory_space<vmem>>, %arg7: memref<128x128xbf16, #tpu.memory_space<vmem>>, %arg8: memref<1x128xf32, #tpu.memory_space<vmem>>, %arg9: memref<1x4x384xbf16, #tpu.memory_space<vmem>>) attributes {dimension_semantics = [#tpu.dimension_semantics<parallel>], iteration_bounds = array<i64: 2>, scalar_prefetch = 0 : i64, scratch_operands = 0 : i64, tpu.core_type = #tpu.core_type<tc>, window_params = [{transform_indices = @transform_0, window_bounds = array<i64: 1, 8, 16>}, {transform_indices = @transform_1, window_bounds = array<i64: 1, 16, 128>}, {transform_indices = @transform_2, window_bounds = array<i64: 1, 8, 8>}, {transform_indices = @transform_3, window_bounds = array<i64: 1, 4, 8>}, {pipeline_mode = #tpu.pipeline_mode<synchronous>, transform_indices = @transform_4, window_bounds = array<i64: 128, 128>}, {pipeline_mode = #tpu.pipeline_mode<synchronous>, transform_indices = @transform_5, window_bounds = array<i64: 1, 128>}, {pipeline_mode = #tpu.pipeline_mode<synchronous>, transform_indices = @transform_6, window_bounds = array<i64: 128, 128>}, {pipeline_mode = #tpu.pipeline_mode<synchronous>, transform_indices = @transform_7, window_bounds = array<i64: 1, 128>}, {transform_indices = @transform_8, window_bounds = array<i64: 1, 4, 384>}]} {
    %c0 = arith.constant 0 : index
    %c0_0 = arith.constant 0 : index
    %c0_1 = arith.constant 0 : index
    %0 = vector.load %arg3[%c0, %c0_0, %c0_1] : memref<1x8x8xbf16, #tpu.memory_space<vmem>>, vector<1x8x8xbf16>
    %1 = vector.shape_cast %0 : vector<1x8x8xbf16> to vector<8x8xbf16>
    %c0_2 = arith.constant 0 : index
    %c0_3 = arith.constant 0 : index
    %c0_4 = arith.constant 0 : index
    %2 = vector.load %arg4[%c0_2, %c0_3, %c0_4] : memref<1x4x8xbf16, #tpu.memory_space<vmem>>, vector<1x4x8xbf16>
    %3 = vector.shape_cast %2 : vector<1x4x8xbf16> to vector<4x8xbf16>
    %c0_5 = arith.constant 0 : index
    %c0_6 = arith.constant 0 : index
    %c0_7 = arith.constant 0 : index
    %4 = vector.load %arg1[%c0_5, %c0_6, %c0_7] : memref<1x8x16xbf16, #tpu.memory_space<vmem>>, vector<1x8x16xbf16>
    %5 = vector.shape_cast %4 : vector<1x8x16xbf16> to vector<8x16xbf16>
    %c0_8 = arith.constant 0 : index
    %c0_9 = arith.constant 0 : index
    %c0_10 = arith.constant 0 : index
    %6 = vector.load %arg2[%c0_8, %c0_9, %c0_10] : memref<1x16x128xbf16, #tpu.memory_space<vmem>>, vector<1x16x128xbf16>
    %7 = vector.shape_cast %6 : vector<1x16x128xbf16> to vector<16x128xbf16>
    %cst = arith.constant dense<0.000000e+00> : vector<8x128xf32>
    %8 = tpu.matmul %5, %7, %cst {dimension_numbers = #tpu.dot_dimension_numbers<[1], [0], [0], [1], [0, 0, 1, 1], [], []>} : vector<8x16xbf16>, vector<16x128xbf16>, vector<8x128xf32> -> vector<8x128xf32>
    %9 = arith.truncf %8 : vector<8x128xf32> to vector<8x128xbf16>
    %c0_11 = arith.constant 0 : index
    %c0_12 = arith.constant 0 : index
    %10 = vector.load %arg5[%c0_11, %c0_12] : memref<128x128xbf16, #tpu.memory_space<vmem>>, vector<128x128xbf16>
    %cst_13 = arith.constant dense<0.000000e+00> : vector<8x128xf32>
    %11 = tpu.matmul %9, %10, %cst_13 {dimension_numbers = #tpu.dot_dimension_numbers<[1], [0], [0], [1], [0, 0, 1, 1], [], []>} : vector<8x128xbf16>, vector<128x128xbf16>, vector<8x128xf32> -> vector<8x128xf32>
    %12 = arith.truncf %11 : vector<8x128xf32> to vector<8x128xbf16>
    %cst_14 = arith.constant dense<0.000000e+00> : vector<8x128xf32>
    %13 = tpu.matmul %1, %12, %cst_14 {dimension_numbers = #tpu.dot_dimension_numbers<[1], [0], [0], [1], [0, 0, 1, 1], [], []>} : vector<8x8xbf16>, vector<8x128xbf16>, vector<8x128xf32> -> vector<8x128xf32>
    %c0_15 = arith.constant 0 : index
    %c0_16 = arith.constant 0 : index
    %14 = vector.load %arg6[%c0_15, %c0_16] : memref<1x128xf32, #tpu.memory_space<vmem>>, vector<1x128xf32>
    %15 = vector.broadcast %14 : vector<1x128xf32> to vector<8x128xf32>
    %16 = arith.addf %13, %15 : vector<8x128xf32>
    %cst_17 = arith.constant 0.000000e+00 : f32
    %17 = vector.broadcast %cst_17 : f32 to vector<8x128xf32>
    %18 = arith.maximumf %16, %17 : vector<8x128xf32>
    %19 = arith.truncf %18 : vector<8x128xf32> to vector<8x128xbf16>
    %c0_18 = arith.constant 0 : index
    %c0_19 = arith.constant 0 : index
    %20 = vector.load %arg7[%c0_18, %c0_19] : memref<128x128xbf16, #tpu.memory_space<vmem>>, vector<128x128xbf16>
    %cst_20 = arith.constant dense<0.000000e+00> : vector<8x128xf32>
    %21 = tpu.matmul %19, %20, %cst_20 {dimension_numbers = #tpu.dot_dimension_numbers<[1], [0], [0], [1], [0, 0, 1, 1], [], []>} : vector<8x128xbf16>, vector<128x128xbf16>, vector<8x128xf32> -> vector<8x128xf32>
    %22 = arith.truncf %21 : vector<8x128xf32> to vector<8x128xbf16>
    %cst_21 = arith.constant dense<0.000000e+00> : vector<8x128xf32>
    %23 = tpu.matmul %1, %22, %cst_21 {dimension_numbers = #tpu.dot_dimension_numbers<[1], [0], [0], [1], [0, 0, 1, 1], [], []>} : vector<8x8xbf16>, vector<8x128xbf16>, vector<8x128xf32> -> vector<8x128xf32>
    %c0_22 = arith.constant 0 : index
    %c0_23 = arith.constant 0 : index
    %24 = vector.load %arg8[%c0_22, %c0_23] : memref<1x128xf32, #tpu.memory_space<vmem>>, vector<1x128xf32>
    %25 = vector.broadcast %24 : vector<1x128xf32> to vector<8x128xf32>
    %26 = arith.addf %23, %25 : vector<8x128xf32>
    %cst_24 = arith.constant 0.000000e+00 : f32
    %27 = vector.broadcast %cst_24 : f32 to vector<8x128xf32>
    %28 = arith.maximumf %26, %27 : vector<8x128xf32>
    %29 = arith.truncf %28 : vector<8x128xf32> to vector<8x128xbf16>
    %cst_25 = arith.constant dense<0.000000e+00> : vector<4x128xf32>
    %30 = tpu.matmul %3, %9, %cst_25 {dimension_numbers = #tpu.dot_dimension_numbers<[1], [0], [0], [1], [0, 0, 1, 1], [], []>} : vector<4x8xbf16>, vector<8x128xbf16>, vector<4x128xf32> -> vector<4x128xf32>
    %31 = arith.truncf %30 : vector<4x128xf32> to vector<4x128xbf16>
    %c0_26 = arith.constant 0 : index
    %c0_27 = arith.constant 0 : index
    %c0_28 = arith.constant 0 : index
    %32 = vector.load %arg9[%c0_26, %c0_27, %c0_28] : memref<1x4x384xbf16, #tpu.memory_space<vmem>>, vector<1x4x128xbf16>
    %33 = vector.shape_cast %32 : vector<1x4x128xbf16> to vector<4x128xbf16>
    %34 = vector.shape_cast %31 : vector<4x128xbf16> to vector<1x4x128xbf16>
    tpu.vector_store %arg9[%c0_26, %c0_27, %c0_28], %34 {strides = array<i32>} : memref<1x4x384xbf16, #tpu.memory_space<vmem>>, vector<1x4x128xbf16>,
    %cst_29 = arith.constant dense<0.000000e+00> : vector<4x128xf32>
    %35 = tpu.matmul %3, %19, %cst_29 {dimension_numbers = #tpu.dot_dimension_numbers<[1], [0], [0], [1], [0, 0, 1, 1], [], []>} : vector<4x8xbf16>, vector<8x128xbf16>, vector<4x128xf32> -> vector<4x128xf32>
    %36 = arith.truncf %35 : vector<4x128xf32> to vector<4x128xbf16>
    %c0_30 = arith.constant 0 : index
    %c0_31 = arith.constant 0 : index
    %c128 = arith.constant 128 : index
    %37 = vector.load %arg9[%c0_30, %c0_31, %c128] : memref<1x4x384xbf16, #tpu.memory_space<vmem>>, vector<1x4x128xbf16>
    %38 = vector.shape_cast %37 : vector<1x4x128xbf16> to vector<4x128xbf16>
    %39 = vector.shape_cast %36 : vector<4x128xbf16> to vector<1x4x128xbf16>
    tpu.vector_store %arg9[%c0_30, %c0_31, %c128], %39 {strides = array<i32>} : memref<1x4x384xbf16, #tpu.memory_space<vmem>>, vector<1x4x128xbf16>,
    %cst_32 = arith.constant dense<0.000000e+00> : vector<4x128xf32>
    %40 = tpu.matmul %3, %29, %cst_32 {dimension_numbers = #tpu.dot_dimension_numbers<[1], [0], [0], [1], [0, 0, 1, 1], [], []>} : vector<4x8xbf16>, vector<8x128xbf16>, vector<4x128xf32> -> vector<4x128xf32>
    %41 = arith.truncf %40 : vector<4x128xf32> to vector<4x128xbf16>
    %c0_33 = arith.constant 0 : index
    %c0_34 = arith.constant 0 : index
    %c256 = arith.constant 256 : index
    %42 = vector.load %arg9[%c0_33, %c0_34, %c256] : memref<1x4x384xbf16, #tpu.memory_space<vmem>>, vector<1x4x128xbf16>
    %43 = vector.shape_cast %42 : vector<1x4x128xbf16> to vector<4x128xbf16>
    %44 = vector.shape_cast %41 : vector<4x128xbf16> to vector<1x4x128xbf16>
    tpu.vector_store %arg9[%c0_33, %c0_34, %c256], %44 {strides = array<i32>} : memref<1x4x384xbf16, #tpu.memory_space<vmem>>, vector<1x4x128xbf16>,
    return
  }
  func.func @transform_0(%arg0: i32) -> (i32, i32, i32) {
    %c0_i32 = arith.constant 0 : i32
    %c0_i32_0 = arith.constant 0 : i32
    %c0_i32_1 = arith.constant 0 : i32
    return %arg0, %c0_i32, %c0_i32_0 : i32, i32, i32
  }
  func.func @transform_1(%arg0: i32) -> (i32, i32, i32) {
    %c0_i32 = arith.constant 0 : i32
    %c0_i32_0 = arith.constant 0 : i32
    %c0_i32_1 = arith.constant 0 : i32
    return %arg0, %c0_i32, %c0_i32_0 : i32, i32, i32
  }
  func.func @transform_2(%arg0: i32) -> (i32, i32, i32) {
    %c0_i32 = arith.constant 0 : i32
    %c0_i32_0 = arith.constant 0 : i32
    %c0_i32_1 = arith.constant 0 : i32
    return %arg0, %c0_i32, %c0_i32_0 : i32, i32, i32
  }
  func.func @transform_3(%arg0: i32) -> (i32, i32, i32) {
    %c0_i32 = arith.constant 0 : i32
    %c0_i32_0 = arith.constant 0 : i32
    %c0_i32_1 = arith.constant 0 : i32
    return %arg0, %c0_i32, %c0_i32_0 : i32, i32, i32
  }
  func.func @transform_4(%arg0: i32) -> (i32, i32) {
    %c0_i32 = arith.constant 0 : i32
    %c0_i32_0 = arith.constant 0 : i32
    %c0_i32_1 = arith.constant 0 : i32
    return %c0_i32, %c0_i32_0 : i32, i32
  }
  func.func @transform_5(%arg0: i32) -> (i32, i32) {
    %c0_i32 = arith.constant 0 : i32
    %c0_i32_0 = arith.constant 0 : i32
    %c0_i32_1 = arith.constant 0 : i32
    return %c0_i32, %c0_i32_0 : i32, i32
  }
  func.func @transform_6(%arg0: i32) -> (i32, i32) {
    %c0_i32 = arith.constant 0 : i32
    %c0_i32_0 = arith.constant 0 : i32
    %c0_i32_1 = arith.constant 0 : i32
    return %c0_i32, %c0_i32_0 : i32, i32
  }
  func.func @transform_7(%arg0: i32) -> (i32, i32) {
    %c0_i32 = arith.constant 0 : i32
    %c0_i32_0 = arith.constant 0 : i32
    %c0_i32_1 = arith.constant 0 : i32
    return %c0_i32, %c0_i32_0 : i32, i32
  }
  func.func @transform_8(%arg0: i32) -> (i32, i32, i32) {
    %c0_i32 = arith.constant 0 : i32
    %c0_i32_0 = arith.constant 0 : i32
    %c0_i32_1 = arith.constant 0 : i32
    return %arg0, %c0_i32, %c0_i32_0 : i32, i32, i32
  }
}

</mosaic_0001>

<llo_original>
// kernel: tpu_custom_call.1
$region0: #{tpu_custom_call.1}
  #allocation0 [shape = 'u32[]', space=smem, size = 0x4, offset = 0x4, fixed_abs, tag = 'smem constant byte address 0x4 - core index']
  #allocation1 [shape = 'u32[144,128]{1,0:T(1,128)}', space=vmem, size = 0x12000, scoped, tag = 'internal scratch']
  %s0 = inlined_call_operand.hbm [shape: bf16[2,8,16], index: 0, kind: input, shape index: {}]
  %s1 = inlined_call_operand.hbm [shape: bf16[2,16,128], index: 1, kind: input, shape index: {}]
  %s2 = inlined_call_operand.hbm [shape: bf16[2,8,8], index: 2, kind: input, shape index: {}]
  %s3 = inlined_call_operand.hbm [shape: bf16[2,4,8], index: 3, kind: input, shape index: {}]
  %s4 = inlined_call_operand.hbm [shape: bf16[128,128], index: 4, kind: input, shape index: {}]
  %s5 = inlined_call_operand.hbm [shape: f32[1,128], index: 5, kind: input, shape index: {}]
  %s6 = inlined_call_operand.hbm [shape: bf16[128,128], index: 6, kind: input, shape index: {}]
  %s7 = inlined_call_operand.hbm [shape: f32[1,128], index: 7, kind: input, shape index: {}]
  %s8 = inlined_call_operand.hbm [shape: bf16[2,4,384], index: 8, kind: output, shape index: {}]
  %s9 = sld [smem:[#allocation0]]
  $region97: #{tpu_custom_call.1} parent=0
    _
  %s11 = ssub.s32 1, %s9
  %s12 = scalar_select 0, %s11, %s9
  $region1: #{tpu_custom_call.1} parent=0
    #allocation2 [shape = 'u8[4096]{0}', space=vmem, size = 0x1000, scoped, tag = 'input window, operand 0']
    #allocation3 [shape = 's32[2]{0}', space=sflag, size = 0x8, scoped, tag = 'scoped memory for tpu_custom_call.1']
    #allocation4 [shape = 's32[2]{0}', space=sflag, size = 0x8, scoped, tag = 'scoped memory for tpu_custom_call.1']
    #allocation5 [shape = 'u8[8192]{0}', space=vmem, size = 0x2000, scoped, tag = 'input window, operand 1']
    #allocation6 [shape = 's32[2]{0}', space=sflag, size = 0x8, scoped, tag = 'scoped memory for tpu_custom_call.1']
    #allocation7 [shape = 'u8[4096]{0}', space=vmem, size = 0x1000, scoped, tag = 'input window, operand 2']
    #allocation8 [shape = 'u8[2048]{0}', space=vmem, size = 0x800, scoped, tag = 'input window, operand 3']
    #allocation9 [shape = 's32[2]{0}', space=sflag, size = 0x8, scoped, tag = 'scoped memory for tpu_custom_call.1']
    #allocation10 [shape = 'u8[32768]{0}', space=vmem, size = 0x8000, scoped, tag = 'input window, operand 4, single buffered']
    #allocation11 [shape = 'u8[512]{0}', space=vmem, size = 0x400, scoped, tag = 'input window, operand 5, single buffered']
    #allocation12 [shape = 's32[1]{0}', space=sflag, size = 0x4, scoped, tag = 'scoped memory for tpu_custom_call.1']
    #allocation13 [shape = 'u8[32768]{0}', space=vmem, size = 0x8000, scoped, tag = 'input window, operand 6, single buffered']
    #allocation14 [shape = 'u8[512]{0}', space=vmem, size = 0x400, scoped, tag = 'input window, operand 7, single buffered']
    #allocation15 [shape = 's32[1]{0}', space=sflag, size = 0x4, scoped, tag = 'scoped memory for tpu_custom_call.1']
    #allocation16 [shape = 'u8[6144]{0}', space=vmem, size = 0x1800, scoped, tag = 'output window, operand 0']
    %13 = vsyncpa [#allocation3], 0
    %s14 = scalar_lea.sflag [#allocation3], 1
    %15 = vsyncpa %s14, 0
    %16 = vsyncpa [#allocation6], 0
    %s17 = scalar_lea.sflag [#allocation6], 1
    %18 = vsyncpa %s17, 0
    %19 = vsyncpa [#allocation9], 0
    %s20 = scalar_lea.sflag [#allocation9], 1
    %21 = vsyncpa %s20, 0
    %22 = vsyncpa [#allocation12], 0
    %23 = vsyncpa [#allocation15], 0
    %24 = vsyncpa [#allocation4], 0
    %s25 = scalar_lea.sflag [#allocation4], 1
    %26 = vsyncpa %s25, 0
    loop: start=0, step=1, limit=4
    $region2: #{tpu_custom_call.1} parent=1 // loop_pre_header
      _
    $region3: #{tpu_custom_call.1} parent=1 // loop_header
      %s28 = sphi 0, %s32
      %p29 = scmp.ge.s32.totalorder %s28, 4
      %s38 = sphi 0, %s40
      %s41 = sphi 0, %s38
      %s42 = sphi 0, %s41
      %s58 = sphi 0, %s42
      %s64 = sphi 0, %s66
      %s67 = sphi 0, %s64
      %s68 = sphi 0, %s67
      %s84 = sphi 0, %s68
      %s90 = sphi 0, %s92
      %s93 = sphi 0, %s90
      %s94 = sphi 0, %s93
      %s110 = sphi 0, %s94
      %s116 = sphi 0, %s118
      %s119 = sphi 0, %s116
      %s120 = sphi 0, %s119
      %s136 = sphi 0, %s120
      %s140 = sphi 0, %s140
      %s142 = sphi 0, %s140
      %s143 = sphi 0, %s142
      %s157 = sphi 0, %s143
      %s161 = sphi 0, %s161
      %s163 = sphi 0, %s161
      %s164 = sphi 0, %s163
      %s178 = sphi 0, %s164
      %s182 = sphi 0, %s182
      %s184 = sphi 0, %s182
      %s185 = sphi 0, %s184
      %s199 = sphi 0, %s185
      %s203 = sphi 0, %s203
      %s205 = sphi 0, %s203
      %s206 = sphi 0, %s205
      %s220 = sphi 0, %s206
      %s226 = sphi 0, %s228
      %s229 = sphi 0, %s226
      %s230 = sphi 0, %s229
      %s246 = sphi 0, %s230
    $region4: #{tpu_custom_call.1} parent=1 // loop_header_branch
      %31 = sbr.rel (%p29) target = $region8
    $region5: #{tpu_custom_call.1} parent=1 // loop_body
      %s33 = ssub.s32 %s28, 1
      %s34 = ssub.s32 %s28, 2
      %s35 = sadd.s32 %s28, 1
      %s36 = ssub.s32 %s28, %s35
      %p37 = scmp.eq.s32.totalorder %s36, 0
      %s39 = sadd.s32 %s38, 1
      %s40 = scalar_select %p37, %s38, %s39
      %p43 = pneg %p37
      %p44 = scmp.eq.s32.totalorder %s28, 1
      %p45 = por %p43, %p44
      %p46 = scmp.ne.s32.totalorder %s38, %s41
      %p47 = scmp.eq.s32.totalorder %s28, 0
      %p48 = por %p46, %p47
      %p49 = scmp.ne.s32.totalorder %s38, %s41
      %p50 = scmp.eq.s32.totalorder %s33, 1
      %p51 = por %p49, %p50
      %p52 = scmp.ne.s32.totalorder %s41, %s42
      %p53 = scmp.eq.s32.totalorder %s33, 0
      %p54 = por %p52, %p53
      %p55 = scmp.ne.s32.totalorder %s41, %s42
      %p56 = scmp.eq.s32.totalorder %s34, 1
      %p57 = por %p55, %p56
      %p59 = scmp.ne.s32.totalorder %s42, %s58
      %p60 = scmp.eq.s32.totalorder %s34, 0
      %p61 = por %p59, %p60
      %s62 = ssub.s32 %s28, %s35
      %p63 = scmp.eq.s32.totalorder %s62, 0
      %s65 = sadd.s32 %s64, 1
      %s66 = scalar_select %p63, %s64, %s65
      %p69 = pneg %p63
      %p70 = scmp.eq.s32.totalorder %s28, 1
      %p71 = por %p69, %p70
      %p72 = scmp.ne.s32.totalorder %s64, %s67
      %p73 = scmp.eq.s32.totalorder %s28, 0
      %p74 = por %p72, %p73
      %p75 = scmp.ne.s32.totalorder %s64, %s67
      %p76 = scmp.eq.s32.totalorder %s33, 1
      %p77 = por %p75, %p76
      %p78 = scmp.ne.s32.totalorder %s67, %s68
      %p79 = scmp.eq.s32.totalorder %s33, 0
      %p80 = por %p78, %p79
      %p81 = scmp.ne.s32.totalorder %s67, %s68
      %p82 = scmp.eq.s32.totalorder %s34, 1
      %p83 = por %p81, %p82
      %p85 = scmp.ne.s32.totalorder %s68, %s84
      %p86 = scmp.eq.s32.totalorder %s34, 0
      %p87 = por %p85, %p86
      %s88 = ssub.s32 %s28, %s35
      %p89 = scmp.eq.s32.totalorder %s88, 0
      %s91 = sadd.s32 %s90, 1
      %s92 = scalar_select %p89, %s90, %s91
      %p95 = pneg %p89
      %p96 = scmp.eq.s32.totalorder %s28, 1
      %p97 = por %p95, %p96
      %p98 = scmp.ne.s32.totalorder %s90, %s93
      %p99 = scmp.eq.s32.totalorder %s28, 0
      %p100 = por %p98, %p99
      %p101 = scmp.ne.s32.totalorder %s90, %s93
      %p102 = scmp.eq.s32.totalorder %s33, 1
      %p103 = por %p101, %p102
      %p104 = scmp.ne.s32.totalorder %s93, %s94
      %p105 = scmp.eq.s32.totalorder %s33, 0
      %p106 = por %p104, %p105
      %p107 = scmp.ne.s32.totalorder %s93, %s94
      %p108 = scmp.eq.s32.totalorder %s34, 1
      %p109 = por %p107, %p108
      %p111 = scmp.ne.s32.totalorder %s94, %s110
      %p112 = scmp.eq.s32.totalorder %s34, 0
      %p113 = por %p111, %p112
      %s114 = ssub.s32 %s28, %s35
      %p115 = scmp.eq.s32.totalorder %s114, 0
      %s117 = sadd.s32 %s116, 1
      %s118 = scalar_select %p115, %s116, %s117
      %p121 = pneg %p115
      %p122 = scmp.eq.s32.totalorder %s28, 1
      %p123 = por %p121, %p122
      %p124 = scmp.ne.s32.totalorder %s116, %s119
      %p125 = scmp.eq.s32.totalorder %s28, 0
      %p126 = por %p124, %p125
      %p127 = scmp.ne.s32.totalorder %s116, %s119
      %p128 = scmp.eq.s32.totalorder %s33, 1
      %p129 = por %p127, %p128
      %p130 = scmp.ne.s32.totalorder %s119, %s120
      %p131 = scmp.eq.s32.totalorder %s33, 0
      %p132 = por %p130, %p131
      %p133 = scmp.ne.s32.totalorder %s119, %s120
      %p134 = scmp.eq.s32.totalorder %s34, 1
      %p135 = por %p133, %p134
      %p137 = scmp.ne.s32.totalorder %s120, %s136
      %p138 = scmp.eq.s32.totalorder %s34, 0
      %p139 = por %p137, %p138
      %s141 = sadd.s32 %s140, 1
      %p144 = scmp.eq.s32.totalorder %s28, 1
      %p145 = scmp.ne.s32.totalorder %s140, %s142
      %p146 = scmp.eq.s32.totalorder %s28, 0
      %p147 = por %p145, %p146
      %p148 = scmp.ne.s32.totalorder %s140, %s142
      %p149 = scmp.eq.s32.totalorder %s33, 1
      %p150 = por %p148, %p149
      %p151 = scmp.ne.s32.totalorder %s142, %s143
      %p152 = scmp.eq.s32.totalorder %s33, 0
      %p153 = por %p151, %p152
      %p154 = scmp.ne.s32.totalorder %s142, %s143
      %p155 = scmp.eq.s32.totalorder %s34, 1
      %p156 = por %p154, %p155
      %p158 = scmp.ne.s32.totalorder %s143, %s157
      %p159 = scmp.eq.s32.totalorder %s34, 0
      %p160 = por %p158, %p159
      %s162 = sadd.s32 %s161, 1
      %p165 = scmp.eq.s32.totalorder %s28, 1
      %p166 = scmp.ne.s32.totalorder %s161, %s163
      %p167 = scmp.eq.s32.totalorder %s28, 0
      %p168 = por %p166, %p167
      %p169 = scmp.ne.s32.totalorder %s161, %s163
      %p170 = scmp.eq.s32.totalorder %s33, 1
      %p171 = por %p169, %p170
      %p172 = scmp.ne.s32.totalorder %s163, %s164
      %p173 = scmp.eq.s32.totalorder %s33, 0
      %p174 = por %p172, %p173
      %p175 = scmp.ne.s32.totalorder %s163, %s164
      %p176 = scmp.eq.s32.totalorder %s34, 1
      %p177 = por %p175, %p176
      %p179 = scmp.ne.s32.totalorder %s164, %s178
      %p180 = scmp.eq.s32.totalorder %s34, 0
      %p181 = por %p179, %p180
      %s183 = sadd.s32 %s182, 1
      %p186 = scmp.eq.s32.totalorder %s28, 1
      %p187 = scmp.ne.s32.totalorder %s182, %s184
      %p188 = scmp.eq.s32.totalorder %s28, 0
      %p189 = por %p187, %p188
      %p190 = scmp.ne.s32.totalorder %s182, %s184
      %p191 = scmp.eq.s32.totalorder %s33, 1
      %p192 = por %p190, %p191
      %p193 = scmp.ne.s32.totalorder %s184, %s185
      %p194 = scmp.eq.s32.totalorder %s33, 0
      %p195 = por %p193, %p194
      %p196 = scmp.ne.s32.totalorder %s184, %s185
      %p197 = scmp.eq.s32.totalorder %s34, 1
      %p198 = por %p196, %p197
      %p200 = scmp.ne.s32.totalorder %s185, %s199
      %p201 = scmp.eq.s32.totalorder %s34, 0
      %p202 = por %p200, %p201
      %s204 = sadd.s32 %s203, 1
      %p207 = scmp.eq.s32.totalorder %s28, 1
      %p208 = scmp.ne.s32.totalorder %s203, %s205
      %p209 = scmp.eq.s32.totalorder %s28, 0
      %p210 = por %p208, %p209
      %p211 = scmp.ne.s32.totalorder %s203, %s205
      %p212 = scmp.eq.s32.totalorder %s33, 1
      %p213 = por %p211, %p212
      %p214 = scmp.ne.s32.totalorder %s205, %s206
      %p215 = scmp.eq.s32.totalorder %s33, 0
      %p216 = por %p214, %p215
      %p217 = scmp.ne.s32.totalorder %s205, %s206
      %p218 = scmp.eq.s32.totalorder %s34, 1
      %p219 = por %p217, %p218
      %p221 = scmp.ne.s32.totalorder %s206, %s220
      %p222 = scmp.eq.s32.totalorder %s34, 0
      %p223 = por %p221, %p222
      %s224 = ssub.s32 %s28, %s35
      %p225 = scmp.eq.s32.totalorder %s224, 0
      %s227 = sadd.s32 %s226, 1
      %s228 = scalar_select %p225, %s226, %s227
      %p231 = pneg %p225
      %p232 = scmp.eq.s32.totalorder %s28, 1
      %p233 = por %p231, %p232
      %p234 = scmp.ne.s32.totalorder %s226, %s229
      %p235 = scmp.eq.s32.totalorder %s28, 0
      %p236 = por %p234, %p235
      %p237 = scmp.ne.s32.totalorder %s226, %s229
      %p238 = scmp.eq.s32.totalorder %s33, 1
      %p239 = por %p237, %p238
      %p240 = scmp.ne.s32.totalorder %s229, %s230
      %p241 = scmp.eq.s32.totalorder %s33, 0
      %p242 = por %p240, %p241
      %p243 = scmp.ne.s32.totalorder %s229, %s230
      %p244 = scmp.eq.s32.totalorder %s34, 1
      %p245 = por %p243, %p244
      %p247 = scmp.ne.s32.totalorder %s230, %s246
      %p248 = scmp.eq.s32.totalorder %s34, 0
      %p249 = por %p247, %p248
      %p250 = scmp.le.s32.totalorder 1, %s28
      %p251 = scmp.lt.s32.totalorder %s28, 3
      %p252 = pnand %p250, %p251
      %p253 = pneg %p252
      // Predicated region
      $region9: #{tpu_custom_call.1} parent=5 // pred_check
        _
      $region10: #{tpu_custom_call.1} parent=5 // pred_check_branch
        %255 = sbr.rel (%p252) target = $region12
      $region11: #{tpu_custom_call.1} parent=5 // pred_region
        %s256 = ssub.s32 %s28, 1
        // Predicated region
        $region13: #{tpu_custom_call.1} parent=11 // pred_check
          %p257 = pneg %p153
        $region14: #{tpu_custom_call.1} parent=11 // pred_check_branch
          %259 = sbr.rel (%p257) target = $region16
        $region15: #{tpu_custom_call.1} parent=11 // pred_region
          %s261 = ssub.s32 1024, 1024
          %262 = vsyncadd [#allocation9], %s261
          %s263 = sshll.u32 [#allocation10], 4
          %s264 = int_to_ptr.vmem [resolvable:$true] %s263
          %269 = dma.hbm_to_vmem [thread:$0]  %s4, 1024, %s264, [#allocation9], 64, 64, 4
        $region16: #{tpu_custom_call.1} parent=11 // pred_fallthru
          _
        // Predicated region
        $region17: #{tpu_custom_call.1} parent=11 // pred_check
          %p270 = pneg %p174
        $region18: #{tpu_custom_call.1} parent=11 // pred_check_branch
          %272 = sbr.rel (%p270) target = $region20
        $region19: #{tpu_custom_call.1} parent=11 // pred_region
          %s274 = ssub.s32 16, 16
          %275 = vsyncadd [#allocation12], %s274
          %s277 = sshll.u32 [#allocation11], 4
          %s278 = int_to_ptr.vmem [resolvable:$true] %s277
          %280 = dma.hbm_to_vmem [thread:$0]  %s5, 16, %s278, [#allocation12]
        $region20: #{tpu_custom_call.1} parent=11 // pred_fallthru
          _
        // Predicated region
        $region21: #{tpu_custom_call.1} parent=11 // pred_check
          %p281 = pneg %p195
        $region22: #{tpu_custom_call.1} parent=11 // pred_check_branch
          %283 = sbr.rel (%p281) target = $region24
        $region23: #{tpu_custom_call.1} parent=11 // pred_region
          %s285 = ssub.s32 1024, 1024
          %286 = vsyncadd [#allocation12], %s285
          %s287 = sshll.u32 [#allocation13], 4
          %s288 = int_to_ptr.vmem [resolvable:$true] %s287
          %293 = dma.hbm_to_vmem [thread:$0]  %s6, 1024, %s288, [#allocation12], 64, 64, 4
        $region24: #{tpu_custom_call.1} parent=11 // pred_fallthru
          _
        // Predicated region
        $region25: #{tpu_custom_call.1} parent=11 // pred_check
          %p294 = pneg %p216
        $region26: #{tpu_custom_call.1} parent=11 // pred_check_branch
          %296 = sbr.rel (%p294) target = $region28
        $region27: #{tpu_custom_call.1} parent=11 // pred_region
          %s298 = ssub.s32 16, 16
          %299 = vsyncadd [#allocation15], %s298
          %s301 = sshll.u32 [#allocation14], 4
          %s302 = int_to_ptr.vmem [resolvable:$true] %s301
          %304 = dma.hbm_to_vmem [thread:$0]  %s7, 16, %s302, [#allocation15]
        $region28: #{tpu_custom_call.1} parent=11 // pred_fallthru
          _
      $region12: #{tpu_custom_call.1} parent=5 // pred_fallthru
        _
      %p305 = scmp.lt.s32.totalorder %s28, 2
      // Predicated region
      $region29: #{tpu_custom_call.1} parent=5 // pred_check
        %p306 = pneg %p305
      $region30: #{tpu_custom_call.1} parent=5 // pred_check_branch
        %308 = sbr.rel (%p306) target = $region32
      $region31: #{tpu_custom_call.1} parent=5 // pred_region
        // Predicated region
        $region33: #{tpu_custom_call.1} parent=31 // pred_check
          %p309 = pneg %p48
        $region34: #{tpu_custom_call.1} parent=31 // pred_check_branch
          %311 = sbr.rel (%p309) target = $region36
        $region35: #{tpu_custom_call.1} parent=31 // pred_region
          %s312 = sand.u32 %s38, 1
          %s313 = scalar_lea.sflag [#allocation3], %s312
          %s314 = sand.u32 %s38, 1
          %s315 = smul.addr %s314, 4
          %s316 = scalar_lea.vmem [#allocation2], %s315
          %s318 = ssub.s32 64, 64
          %319 = vsyncadd %s313, %s318
          %s320 = smul.addr %s28, 64
          %s321 = scalar_lea.hbm %s0, %s320
          %s323 = sshll.u32 %s316, 4
          %s324 = int_to_ptr.vmem [resolvable:$true] %s323
          %326 = dma.hbm_to_vmem [thread:$0]  %s321, 64, %s324, %s313
        $region36: #{tpu_custom_call.1} parent=31 // pred_fallthru
          _
        // Predicated region
        $region37: #{tpu_custom_call.1} parent=31 // pred_check
          %p327 = pneg %p74
        $region38: #{tpu_custom_call.1} parent=31 // pred_check_branch
          %329 = sbr.rel (%p327) target = $region40
        $region39: #{tpu_custom_call.1} parent=31 // pred_region
          %s330 = sand.u32 %s28, 1
          %s331 = scalar_lea.sflag [#allocation6], %s330
          %s332 = sand.u32 %s64, 1
          %s333 = smul.addr %s332, 8
          %s334 = scalar_lea.vmem [#allocation5], %s333
          %s336 = ssub.s32 128, 128
          %337 = vsyncadd %s331, %s336
          %s338 = smul.addr %s28, 2
          %s339 = smul.addr %s338, 64
          %s340 = scalar_lea.hbm %s1, %s339
          %s341 = sshll.u32 %s334, 4
          %s342 = int_to_ptr.vmem [resolvable:$true] %s341
          %347 = dma.hbm_to_vmem [thread:$0]  %s340, 128, %s342, %s331, 64, 64, 4
        $region40: #{tpu_custom_call.1} parent=31 // pred_fallthru
          _
        // Predicated region
        $region41: #{tpu_custom_call.1} parent=31 // pred_check
          %p348 = pneg %p100
        $region42: #{tpu_custom_call.1} parent=31 // pred_check_branch
          %350 = sbr.rel (%p348) target = $region44
        $region43: #{tpu_custom_call.1} parent=31 // pred_region
          %s351 = sand.u32 %s28, 1
          %s352 = scalar_lea.sflag [#allocation6], %s351
          %s353 = sand.u32 %s90, 1
          %s354 = smul.addr %s353, 4
          %s355 = scalar_lea.vmem [#allocation7], %s354
          %s357 = ssub.s32 64, 64
          %358 = vsyncadd %s352, %s357
          %s359 = smul.addr %s28, 64
          %s360 = scalar_lea.hbm %s2, %s359
          %s362 = sshll.u32 %s355, 4
          %s363 = int_to_ptr.vmem [resolvable:$true] %s362
          %365 = dma.hbm_to_vmem [thread:$0]  %s360, 64, %s363, %s352
        $region44: #{tpu_custom_call.1} parent=31 // pred_fallthru
          _
        // Predicated region
        $region45: #{tpu_custom_call.1} parent=31 // pred_check
          %p366 = pneg %p126
        $region46: #{tpu_custom_call.1} parent=31 // pred_check_branch
          %368 = sbr.rel (%p366) target = $region48
        $region47: #{tpu_custom_call.1} parent=31 // pred_region
          %s369 = sand.u32 %s28, 1
          %s370 = scalar_lea.sflag [#allocation9], %s369
          %s371 = sand.u32 %s116, 1
          %s372 = smul.addr %s371, 2
          %s373 = scalar_lea.vmem [#allocation8], %s372
          %s375 = ssub.s32 32, 32
          %376 = vsyncadd %s370, %s375
          %s377 = smul.addr %s28, 32
          %s378 = scalar_lea.hbm %s3, %s377
          %s380 = sshll.u32 %s373, 4
          %s381 = int_to_ptr.vmem [resolvable:$true] %s380
          %383 = dma.hbm_to_vmem [thread:$0]  %s378, 32, %s381, %s370
        $region48: #{tpu_custom_call.1} parent=31 // pred_fallthru
          _
      $region32: #{tpu_custom_call.1} parent=5 // pred_fallthru
        _
      %p384 = scmp.le.s32.totalorder 1, %s28
      %p385 = scmp.lt.s32.totalorder %s28, 3
      %p386 = pnand %p384, %p385
      %p387 = pneg %p386
      // Predicated region
      $region49: #{tpu_custom_call.1} parent=5 // pred_check
        _
      $region50: #{tpu_custom_call.1} parent=5 // pred_check_branch
        %389 = sbr.rel (%p386) target = $region52
      $region51: #{tpu_custom_call.1} parent=5 // pred_region
        %s390 = ssub.s32 %s28, 1
        %s391 = sand.u32 %s41, 1
        %s392 = scalar_lea.sflag [#allocation3], %s391
        %s393 = sand.u32 %s41, 1
        %s394 = smul.addr %s393, 4
        %s395 = scalar_lea.vmem [#allocation2], %s394
        // Predicated region
        $region53: #{tpu_custom_call.1} parent=51 // pred_check
          %p396 = pneg %p54
        $region54: #{tpu_custom_call.1} parent=51 // pred_check_branch
          %398 = sbr.rel (%p396) target = $region56
        $region55: #{tpu_custom_call.1} parent=51 // pred_region
          %399 = dma.done %s392, 64
        $region56: #{tpu_custom_call.1} parent=51 // pred_fallthru
          _
        %s400 = sand.u32 %s33, 1
        %s401 = scalar_lea.sflag [#allocation6], %s400
        %s402 = sand.u32 %s67, 1
        %s403 = smul.addr %s402, 8
        %s404 = scalar_lea.vmem [#allocation5], %s403
        // Predicated region
        $region57: #{tpu_custom_call.1} parent=51 // pred_check
          %p405 = pneg %p80
        $region58: #{tpu_custom_call.1} parent=51 // pred_check_branch
          %407 = sbr.rel (%p405) target = $region60
        $region59: #{tpu_custom_call.1} parent=51 // pred_region
          %408 = dma.done %s401, 128
        $region60: #{tpu_custom_call.1} parent=51 // pred_fallthru
          _
        %s409 = sand.u32 %s33, 1
        %s410 = scalar_lea.sflag [#allocation6], %s409
        %s411 = sand.u32 %s93, 1
        %s412 = smul.addr %s411, 4
        %s413 = scalar_lea.vmem [#allocation7], %s412
        // Predicated region
        $region61: #{tpu_custom_call.1} parent=51 // pred_check
          %p414 = pneg %p106
        $region62: #{tpu_custom_call.1} parent=51 // pred_check_branch
          %416 = sbr.rel (%p414) target = $region64
        $region63: #{tpu_custom_call.1} parent=51 // pred_region
          %417 = dma.done %s410, 64
        $region64: #{tpu_custom_call.1} parent=51 // pred_fallthru
          _
        %s418 = sand.u32 %s33, 1
        %s419 = scalar_lea.sflag [#allocation9], %s418
        %s420 = sand.u32 %s119, 1
        %s421 = smul.addr %s420, 2
        %s422 = scalar_lea.vmem [#allocation8], %s421
        // Predicated region
        $region65: #{tpu_custom_call.1} parent=51 // pred_check
          %p423 = pneg %p132
        $region66: #{tpu_custom_call.1} parent=51 // pred_check_branch
          %425 = sbr.rel (%p423) target = $region68
        $region67: #{tpu_custom_call.1} parent=51 // pred_region
          %426 = dma.done %s419, 32
        $region68: #{tpu_custom_call.1} parent=51 // pred_fallthru
          _
        // Predicated region
        $region69: #{tpu_custom_call.1} parent=51 // pred_check
          %p427 = pneg %p153
        $region70: #{tpu_custom_call.1} parent=51 // pred_check_branch
          %429 = sbr.rel (%p427) target = $region72
        $region71: #{tpu_custom_call.1} parent=51 // pred_region
          %430 = dma.done [#allocation9], 1024
        $region72: #{tpu_custom_call.1} parent=51 // pred_fallthru
          _
        // Predicated region
        $region73: #{tpu_custom_call.1} parent=51 // pred_check
          %p431 = pneg %p174
        $region74: #{tpu_custom_call.1} parent=51 // pred_check_branch
          %433 = sbr.rel (%p431) target = $region76
        $region75: #{tpu_custom_call.1} parent=51 // pred_region
          %434 = dma.done [#allocation12], 16
        $region76: #{tpu_custom_call.1} parent=51 // pred_fallthru
          _
        // Predicated region
        $region77: #{tpu_custom_call.1} parent=51 // pred_check
          %p435 = pneg %p195
        $region78: #{tpu_custom_call.1} parent=51 // pred_check_branch
          %437 = sbr.rel (%p435) target = $region80
        $region79: #{tpu_custom_call.1} parent=51 // pred_region
          %438 = dma.done [#allocation12], 1024
        $region80: #{tpu_custom_call.1} parent=51 // pred_fallthru
          _
        // Predicated region
        $region81: #{tpu_custom_call.1} parent=51 // pred_check
          %p439 = pneg %p216
        $region82: #{tpu_custom_call.1} parent=51 // pred_check_branch
          %441 = sbr.rel (%p439) target = $region84
        $region83: #{tpu_custom_call.1} parent=51 // pred_region
          %442 = dma.done [#allocation15], 16
        $region84: #{tpu_custom_call.1} parent=51 // pred_fallthru
          _
        %s443 = sand.u32 %s41, 1
        %s444 = scalar_lea.sflag [#allocation3], %s443
        %s445 = sand.u32 %s41, 1
        %s446 = smul.addr %s445, 4
        %s447 = scalar_lea.vmem [#allocation2], %s446
        %p448 = pneg %p54
        %p449 = pneg %p51
        %s450 = sand.u32 %s33, 1
        %s451 = scalar_lea.sflag [#allocation6], %s450
        %s452 = sand.u32 %s67, 1
        %s453 = smul.addr %s452, 8
        %s454 = scalar_lea.vmem [#allocation5], %s453
        %p455 = pneg %p80
        %p456 = pneg %p77
        %s457 = sand.u32 %s33, 1
        %s458 = scalar_lea.sflag [#allocation6], %s457
        %s459 = sand.u32 %s93, 1
        %s460 = smul.addr %s459, 4
        %s461 = scalar_lea.vmem [#allocation7], %s460
        %p462 = pneg %p106
        %p463 = pneg %p103
        %s464 = sand.u32 %s33, 1
        %s465 = scalar_lea.sflag [#allocation9], %s464
        %s466 = sand.u32 %s119, 1
        %s467 = smul.addr %s466, 2
        %s468 = scalar_lea.vmem [#allocation8], %s467
        %p469 = pneg %p132
        %p470 = pneg %p129
        %p471 = pneg %p153
        %p472 = pneg %p150
        %p473 = pneg %p174
        %p474 = pneg %p171
        %p475 = pneg %p195
        %p476 = pneg %p192
        %p477 = pneg %p216
        %p478 = pneg %p213
        %p479 = pneg %p242
        %p480 = pneg %p239
        %s481 = sand.u32 %s229, 1
        %s482 = scalar_lea.sflag [#allocation4], %s481
        %s483 = sand.u32 %s229, 1
        %s484 = smul.addr %s483, 6
        %s485 = scalar_lea.vmem [#allocation16], %s484
        %v487 = vld [vmem:[%s413] sm:$0xf]
        %v488 = vld [vmem:[%s422] sm:$0x3]
        %v489 = vld [vmem:[%s395] sm:$0xf]
        %v490 = vld [vmem:[%s404] sm:$0xf]
        %v491 = vld [vmem:[%s404 + $0x4] sm:$0xf]
        %v494 = vunpack.c.l.b16 %v490
        %v495 = vunpack.c.l.b16 %v491
        %v496 = vpack.c.b16 %v495, %v494
        %vm498 = vcmask 130048
        %v500 = vsel %vm498, %v489, 0
        %502 = vmatprep.subr.bf16.mxu0 0
        %503 = vmatpush1.bf16.msra.mxu0 %v496
        %504 = vmatprep.subr.bf16.mxu0 0
        %505 = vmatpush1.bf16.msra.mxu0 0
        %506 = vmatprep.subr.bf16.mxu0 0
        %507 = vmatpush1.bf16.msra.mxu0 0
        %508 = vmatprep.subr.bf16.mxu0 0
        %509 = vmatpush1.bf16.msra.mxu0 0
        %510 = vmatprep.subr.bf16.mxu0 0
        %511 = vmatpush1.bf16.msra.mxu0 0
        %512 = vmatprep.subr.bf16.mxu0 0
        %513 = vmatpush1.bf16.msra.mxu0 0
        %514 = vmatprep.subr.bf16.mxu0 0
        %515 = vmatpush1.bf16.msra.mxu0 0
        %516 = vmatprep.subr.bf16.mxu0 0
        %517 = vmatpush1.bf16.msra.mxu0 0
        %518 = vmatprep.subr.bf16.mxu0 0
        %519 = vmatpush1.bf16.msra.mxu0 0
        %520 = vmatprep.subr.bf16.mxu0 0
        %521 = vmatpush1.bf16.msra.mxu0 0
        %522 = vmatprep.subr.bf16.mxu0 0
        %523 = vmatpush1.bf16.msra.mxu0 0
        %524 = vmatprep.subr.bf16.mxu0 0
        %525 = vmatpush1.bf16.msra.mxu0 0
        %526 = vmatprep.subr.bf16.mxu0 0
        %527 = vmatpush1.bf16.msra.mxu0 0
        %528 = vmatprep.subr.bf16.mxu0 0
        %529 = vmatpush1.bf16.msra.mxu0 0
        %530 = vmatprep.subr.bf16.mxu0 0
        %531 = vmatpush1.bf16.msra.mxu0 0
        %532 = vmatprep.subr.bf16.mxu0 0
        %533 = vmatpush1.bf16.msra.mxu0 0
        %534 = vmatprep.mubr.bf16.mxu0 0
        %535 = vmatmul.mubr.bf16.gmra.mrb[0].mxu0 %v500
        %v536 = vpop.f32.mrb[0].mxu0
        %v537 = vadd.f32 0.0, %v536
        %v538 = vpop.f32.mrb[0].mxu0
        %v539 = vpop.f32.mrb[0].mxu0
        %v540 = vpop.f32.mrb[0].mxu0
        %541 = vdwg.mxu0
        %v542 = vpack.c.bf16 %v537, %v537
        %v543 = vld [vmem:[#allocation10] sm:$0xf]
        %v544 = vld [vmem:[#allocation10 + $0x4] sm:$0xf]
        %v545 = vld [vmem:[#allocation10 + $0x8] sm:$0xf]
        %v546 = vld [vmem:[#allocation10 + $0xc] sm:$0xf]
        %v547 = vld [vmem:[#allocation10 + $0x10] sm:$0xf]
        %v548 = vld [vmem:[#allocation10 + $0x14] sm:$0xf]
        %v549 = vld [vmem:[#allocation10 + $0x18] sm:$0xf]
        %v550 = vld [vmem:[#allocation10 + $0x1c] sm:$0xf]
        %v551 = vld [vmem:[#allocation10 + $0x20] sm:$0xf]
        %v552 = vld [vmem:[#allocation10 + $0x24] sm:$0xf]
        %v553 = vld [vmem:[#allocation10 + $0x28] sm:$0xf]
        %v554 = vld [vmem:[#allocation10 + $0x2c] sm:$0xf]
        %v555 = vld [vmem:[#allocation10 + $0x30] sm:$0xf]
        %v556 = vld [vmem:[#allocation10 + $0x34] sm:$0xf]
        %v557 = vld [vmem:[#allocation10 + $0x38] sm:$0xf]
        %v558 = vld [vmem:[#allocation10 + $0x3c] sm:$0xf]
        %v575 = vunpack.c.l.b16 %v543
        %v576 = vunpack.c.l.b16 %v544
        %v577 = vunpack.c.l.b16 %v545
        %v578 = vunpack.c.l.b16 %v546
        %v579 = vunpack.c.l.b16 %v547
        %v580 = vunpack.c.l.b16 %v548
        %v581 = vunpack.c.l.b16 %v549
        %v582 = vunpack.c.l.b16 %v550
        %v583 = vunpack.c.l.b16 %v551
        %v584 = vunpack.c.l.b16 %v552
        %v585 = vunpack.c.l.b16 %v553
        %v586 = vunpack.c.l.b16 %v554
        %v587 = vunpack.c.l.b16 %v555
        %v588 = vunpack.c.l.b16 %v556
        %v589 = vunpack.c.l.b16 %v557
        %v590 = vunpack.c.l.b16 %v558
        %v591 = vpack.c.b16 %v576, %v575
        %v592 = vpack.c.b16 %v578, %v577
        %v593 = vpack.c.b16 %v580, %v579
        %v594 = vpack.c.b16 %v582, %v581
        %v595 = vpack.c.b16 %v584, %v583
        %v596 = vpack.c.b16 %v586, %v585
        %v597 = vpack.c.b16 %v588, %v587
        %v598 = vpack.c.b16 %v590, %v589
        %607 = vmatprep.subr.bf16.mxu0 0
        %608 = vmatpush1.bf16.msra.mxu0 %v591
        %609 = vmatprep.subr.bf16.mxu0 0
        %610 = vmatpush1.bf16.msra.mxu0 %v592
        %611 = vmatprep.subr.bf16.mxu0 0
        %612 = vmatpush1.bf16.msra.mxu0 %v593
        %613 = vmatprep.subr.bf16.mxu0 0
        %614 = vmatpush1.bf16.msra.mxu0 %v594
        %615 = vmatprep.subr.bf16.mxu0 0
        %616 = vmatpush1.bf16.msra.mxu0 %v595
        %617 = vmatprep.subr.bf16.mxu0 0
        %618 = vmatpush1.bf16.msra.mxu0 %v596
        %619 = vmatprep.subr.bf16.mxu0 0
        %620 = vmatpush1.bf16.msra.mxu0 %v597
        %621 = vmatprep.subr.bf16.mxu0 0
        %622 = vmatpush1.bf16.msra.mxu0 %v598
        %623 = vmatprep.subr.bf16.mxu0 0
        %624 = vmatpush1.bf16.msra.mxu0 0
        %625 = vmatprep.subr.bf16.mxu0 0
        %626 = vmatpush1.bf16.msra.mxu0 0
        %627 = vmatprep.subr.bf16.mxu0 0
        %628 = vmatpush1.bf16.msra.mxu0 0
        %629 = vmatprep.subr.bf16.mxu0 0
        %630 = vmatpush1.bf16.msra.mxu0 0
        %631 = vmatprep.subr.bf16.mxu0 0
        %632 = vmatpush1.bf16.msra.mxu0 0
        %633 = vmatprep.subr.bf16.mxu0 0
        %634 = vmatpush1.bf16.msra.mxu0 0
        %635 = vmatprep.subr.bf16.mxu0 0
        %636 = vmatpush1.bf16.msra.mxu0 0
        %637 = vmatprep.subr.bf16.mxu0 0
        %638 = vmatpush1.bf16.msra.mxu0 0
        %639 = vmatprep.mubr.bf16.mxu0 0
        %640 = vmatmul.mubr.bf16.gmra.mrb[0].mxu0 %v542
        %v641 = vpop.f32.mrb[0].mxu0
        %v642 = vadd.f32 0.0, %v641
        %v643 = vpop.f32.mrb[0].mxu0
        %v644 = vpop.f32.mrb[0].mxu0
        %v645 = vpop.f32.mrb[0].mxu0
        %646 = vdwg.mxu0
        %v647 = vpack.c.bf16 %v642, %v642
        %v648 = vld [vmem:[#allocation11] sm:$0x1]
        %v650 = vlaneseq
        %v651 = vshrl.u32 %v650, 7
        %v652 = vsub.s32 0, %v651
        %v653 = vrot.slane %v648, %v652
        %vm655 = vcmask 64512
        %v657 = vsel %vm655, %v487, 0
        %vm659 = vcmask 1043456
        %v661 = vsel %vm659, %v647, 0
        %663 = vmatprep.subr.bf16.mxu0 0
        %664 = vmatpush1.bf16.msra.mxu0 %v661
        %665 = vmatprep.subr.bf16.mxu0 0
        %666 = vmatpush1.bf16.msra.mxu0 0
        %667 = vmatprep.subr.bf16.mxu0 0
        %668 = vmatpush1.bf16.msra.mxu0 0
        %669 = vmatprep.subr.bf16.mxu0 0
        %670 = vmatpush1.bf16.msra.mxu0 0
        %671 = vmatprep.subr.bf16.mxu0 0
        %672 = vmatpush1.bf16.msra.mxu0 0
        %673 = vmatprep.subr.bf16.mxu0 0
        %674 = vmatpush1.bf16.msra.mxu0 0
        %675 = vmatprep.subr.bf16.mxu0 0
        %676 = vmatpush1.bf16.msra.mxu0 0
        %677 = vmatprep.subr.bf16.mxu0 0
        %678 = vmatpush1.bf16.msra.mxu0 0
        %679 = vmatprep.subr.bf16.mxu0 0
        %680 = vmatpush1.bf16.msra.mxu0 0
        %681 = vmatprep.subr.bf16.mxu0 0
        %682 = vmatpush1.bf16.msra.mxu0 0
        %683 = vmatprep.subr.bf16.mxu0 0
        %684 = vmatpush1.bf16.msra.mxu0 0
        %685 = vmatprep.subr.bf16.mxu0 0
        %686 = vmatpush1.bf16.msra.mxu0 0
        %687 = vmatprep.subr.bf16.mxu0 0
        %688 = vmatpush1.bf16.msra.mxu0 0
        %689 = vmatprep.subr.bf16.mxu0 0
        %690 = vmatpush1.bf16.msra.mxu0 0
        %691 = vmatprep.subr.bf16.mxu0 0
        %692 = vmatpush1.bf16.msra.mxu0 0
        %693 = vmatprep.subr.bf16.mxu0 0
        %694 = vmatpush1.bf16.msra.mxu0 0
        %695 = vmatprep.mubr.bf16.mxu0 0
        %696 = vmatmul.mubr.bf16.gmra.mrb[0].mxu0 %v657
        %v697 = vpop.f32.mrb[0].mxu0
        %v698 = vadd.f32 %v653, %v697
        %v699 = vpop.f32.mrb[0].mxu0
        %v700 = vpop.f32.mrb[0].mxu0
        %v701 = vpop.f32.mrb[0].mxu0
        %702 = vdwg.mxu0
        %v703 = vmax.f32 %v698, 0.0
        %v704 = vpack.c.bf16 %v703, %v703
        %v705 = vld [vmem:[#allocation13] sm:$0xf]
        %v706 = vld [vmem:[#allocation13 + $0x4] sm:$0xf]
        %v707 = vld [vmem:[#allocation13 + $0x8] sm:$0xf]
        %v708 = vld [vmem:[#allocation13 + $0xc] sm:$0xf]
        %v709 = vld [vmem:[#allocation13 + $0x10] sm:$0xf]
        %v710 = vld [vmem:[#allocation13 + $0x14] sm:$0xf]
        %v711 = vld [vmem:[#allocation13 + $0x18] sm:$0xf]
        %v712 = vld [vmem:[#allocation13 + $0x1c] sm:$0xf]
        %v713 = vld [vmem:[#allocation13 + $0x20] sm:$0xf]
        %v714 = vld [vmem:[#allocation13 + $0x24] sm:$0xf]
        %v715 = vld [vmem:[#allocation13 + $0x28] sm:$0xf]
        %v716 = vld [vmem:[#allocation13 + $0x2c] sm:$0xf]
        %v717 = vld [vmem:[#allocation13 + $0x30] sm:$0xf]
        %v718 = vld [vmem:[#allocation13 + $0x34] sm:$0xf]
        %v719 = vld [vmem:[#allocation13 + $0x38] sm:$0xf]
        %v720 = vld [vmem:[#allocation13 + $0x3c] sm:$0xf]
        %v737 = vunpack.c.l.b16 %v705
        %v738 = vunpack.c.l.b16 %v706
        %v739 = vunpack.c.l.b16 %v707
        %v740 = vunpack.c.l.b16 %v708
        %v741 = vunpack.c.l.b16 %v709
        %v742 = vunpack.c.l.b16 %v710
        %v743 = vunpack.c.l.b16 %v711
        %v744 = vunpack.c.l.b16 %v712
        %v745 = vunpack.c.l.b16 %v713
        %v746 = vunpack.c.l.b16 %v714
        %v747 = vunpack.c.l.b16 %v715
        %v748 = vunpack.c.l.b16 %v716
        %v749 = vunpack.c.l.b16 %v717
        %v750 = vunpack.c.l.b16 %v718
        %v751 = vunpack.c.l.b16 %v719
        %v752 = vunpack.c.l.b16 %v720
        %v753 = vpack.c.b16 %v738, %v737
        %v754 = vpack.c.b16 %v740, %v739
        %v755 = vpack.c.b16 %v742, %v741
        %v756 = vpack.c.b16 %v744, %v743
        %v757 = vpack.c.b16 %v746, %v745
        %v758 = vpack.c.b16 %v748, %v747
        %v759 = vpack.c.b16 %v750, %v749
        %v760 = vpack.c.b16 %v752, %v751
        %769 = vmatprep.subr.bf16.mxu0 0
        %770 = vmatpush1.bf16.msra.mxu0 %v753
        %771 = vmatprep.subr.bf16.mxu0 0
        %772 = vmatpush1.bf16.msra.mxu0 %v754
        %773 = vmatprep.subr.bf16.mxu0 0
        %774 = vmatpush1.bf16.msra.mxu0 %v755
        %775 = vmatprep.subr.bf16.mxu0 0
        %776 = vmatpush1.bf16.msra.mxu0 %v756
        %777 = vmatprep.subr.bf16.mxu0 0
        %778 = vmatpush1.bf16.msra.mxu0 %v757
        %779 = vmatprep.subr.bf16.mxu0 0
        %780 = vmatpush1.bf16.msra.mxu0 %v758
        %781 = vmatprep.subr.bf16.mxu0 0
        %782 = vmatpush1.bf16.msra.mxu0 %v759
        %783 = vmatprep.subr.bf16.mxu0 0
        %784 = vmatpush1.bf16.msra.mxu0 %v760
        %785 = vmatprep.subr.bf16.mxu0 0
        %786 = vmatpush1.bf16.msra.mxu0 0
        %787 = vmatprep.subr.bf16.mxu0 0
        %788 = vmatpush1.bf16.msra.mxu0 0
        %789 = vmatprep.subr.bf16.mxu0 0
        %790 = vmatpush1.bf16.msra.mxu0 0
        %791 = vmatprep.subr.bf16.mxu0 0
        %792 = vmatpush1.bf16.msra.mxu0 0
        %793 = vmatprep.subr.bf16.mxu0 0
        %794 = vmatpush1.bf16.msra.mxu0 0
        %795 = vmatprep.subr.bf16.mxu0 0
        %796 = vmatpush1.bf16.msra.mxu0 0
        %797 = vmatprep.subr.bf16.mxu0 0
        %798 = vmatpush1.bf16.msra.mxu0 0
        %799 = vmatprep.subr.bf16.mxu0 0
        %800 = vmatpush1.bf16.msra.mxu0 0
        %801 = vmatprep.mubr.bf16.mxu0 0
        %802 = vmatmul.mubr.bf16.gmra.mrb[0].mxu0 %v704
        %v803 = vpop.f32.mrb[0].mxu0
        %v804 = vadd.f32 0.0, %v803
        %v805 = vpop.f32.mrb[0].mxu0
        %v806 = vpop.f32.mrb[0].mxu0
        %v807 = vpop.f32.mrb[0].mxu0
        %808 = vdwg.mxu0
        %v809 = vpack.c.bf16 %v804, %v804
        %v810 = vld [vmem:[#allocation14] sm:$0x1]
        %v812 = vlaneseq
        %v813 = vshrl.u32 %v812, 7
        %v814 = vsub.s32 0, %v813
        %v815 = vrot.slane %v810, %v814
        %v818 = vsel %vm659, %v809, 0
        %820 = vmatprep.subr.bf16.mxu0 0
        %821 = vmatpush1.bf16.msra.mxu0 %v818
        %822 = vmatprep.subr.bf16.mxu0 0
        %823 = vmatpush1.bf16.msra.mxu0 0
        %824 = vmatprep.subr.bf16.mxu0 0
        %825 = vmatpush1.bf16.msra.mxu0 0
        %826 = vmatprep.subr.bf16.mxu0 0
        %827 = vmatpush1.bf16.msra.mxu0 0
        %828 = vmatprep.subr.bf16.mxu0 0
        %829 = vmatpush1.bf16.msra.mxu0 0
        %830 = vmatprep.subr.bf16.mxu0 0
        %831 = vmatpush1.bf16.msra.mxu0 0
        %832 = vmatprep.subr.bf16.mxu0 0
        %833 = vmatpush1.bf16.msra.mxu0 0
        %834 = vmatprep.subr.bf16.mxu0 0
        %835 = vmatpush1.bf16.msra.mxu0 0
        %836 = vmatprep.subr.bf16.mxu0 0
        %837 = vmatpush1.bf16.msra.mxu0 0
        %838 = vmatprep.subr.bf16.mxu0 0
        %839 = vmatpush1.bf16.msra.mxu0 0
        %840 = vmatprep.subr.bf16.mxu0 0
        %841 = vmatpush1.bf16.msra.mxu0 0
        %842 = vmatprep.subr.bf16.mxu0 0
        %843 = vmatpush1.bf16.msra.mxu0 0
        %844 = vmatprep.subr.bf16.mxu0 0
        %845 = vmatpush1.bf16.msra.mxu0 0
        %846 = vmatprep.subr.bf16.mxu0 0
        %847 = vmatpush1.bf16.msra.mxu0 0
        %848 = vmatprep.subr.bf16.mxu0 0
        %849 = vmatpush1.bf16.msra.mxu0 0
        %850 = vmatprep.subr.bf16.mxu0 0
        %851 = vmatpush1.bf16.msra.mxu0 0
        %852 = vmatprep.mubr.bf16.mxu0 0
        %853 = vmatmul.mubr.bf16.gmra.mrb[0].mxu0 %v657
        %v854 = vpop.f32.mrb[0].mxu0
        %v855 = vadd.f32 %v815, %v854
        %v856 = vpop.f32.mrb[0].mxu0
        %v857 = vpop.f32.mrb[0].mxu0
        %v858 = vpop.f32.mrb[0].mxu0
        %859 = vdwg.mxu0
        %v860 = vmax.f32 %v855, 0.0
        %v861 = vpack.c.bf16 %v860, %v860
        %v863 = vsel %vm655, %v488, 0
        %v866 = vsel %vm659, %v542, 0
        %868 = vmatprep.subr.bf16.mxu0 0
        %869 = vmatpush1.bf16.msra.mxu0 %v866
        %870 = vmatprep.subr.bf16.mxu0 0
        %871 = vmatpush1.bf16.msra.mxu0 0
        %872 = vmatprep.subr.bf16.mxu0 0
        %873 = vmatpush1.bf16.msra.mxu0 0
        %874 = vmatprep.subr.bf16.mxu0 0
        %875 = vmatpush1.bf16.msra.mxu0 0
        %876 = vmatprep.subr.bf16.mxu0 0
        %877 = vmatpush1.bf16.msra.mxu0 0
        %878 = vmatprep.subr.bf16.mxu0 0
        %879 = vmatpush1.bf16.msra.mxu0 0
        %880 = vmatprep.subr.bf16.mxu0 0
        %881 = vmatpush1.bf16.msra.mxu0 0
        %882 = vmatprep.subr.bf16.mxu0 0
        %883 = vmatpush1.bf16.msra.mxu0 0
        %884 = vmatprep.subr.bf16.mxu0 0
        %885 = vmatpush1.bf16.msra.mxu0 0
        %886 = vmatprep.subr.bf16.mxu0 0
        %887 = vmatpush1.bf16.msra.mxu0 0
        %888 = vmatprep.subr.bf16.mxu0 0
        %889 = vmatpush1.bf16.msra.mxu0 0
        %890 = vmatprep.subr.bf16.mxu0 0
        %891 = vmatpush1.bf16.msra.mxu0 0
        %892 = vmatprep.subr.bf16.mxu0 0
        %893 = vmatpush1.bf16.msra.mxu0 0
        %894 = vmatprep.subr.bf16.mxu0 0
        %895 = vmatpush1.bf16.msra.mxu0 0
        %896 = vmatprep.subr.bf16.mxu0 0
        %897 = vmatpush1.bf16.msra.mxu0 0
        %898 = vmatprep.subr.bf16.mxu0 0
        %899 = vmatpush1.bf16.msra.mxu0 0
        %900 = vmatprep.mubr.bf16.mxu0 0
        %901 = vmatmul.mubr.bf16.gmra.mrb[0].mxu0 %v863
        %v902 = vpop.f32.mrb[0].mxu0
        %v903 = vadd.f32 0.0, %v902
        %v904 = vpop.f32.mrb[0].mxu0
        %v905 = vpop.f32.mrb[0].mxu0
        %v906 = vpop.f32.mrb[0].mxu0
        %907 = vdwg.mxu0
        %v908 = vpack.c.bf16 %v903, %v903
        %909 = vst [vmem:[%s485] sm:$0x3] %v908
        %v911 = vsel %vm659, %v704, 0
        %913 = vmatprep.subr.bf16.mxu0 0
        %914 = vmatpush1.bf16.msra.mxu0 %v911
        %915 = vmatprep.subr.bf16.mxu0 0
        %916 = vmatpush1.bf16.msra.mxu0 0
        %917 = vmatprep.subr.bf16.mxu0 0
        %918 = vmatpush1.bf16.msra.mxu0 0
        %919 = vmatprep.subr.bf16.mxu0 0
        %920 = vmatpush1.bf16.msra.mxu0 0
        %921 = vmatprep.subr.bf16.mxu0 0
        %922 = vmatpush1.bf16.msra.mxu0 0
        %923 = vmatprep.subr.bf16.mxu0 0
        %924 = vmatpush1.bf16.msra.mxu0 0
        %925 = vmatprep.subr.bf16.mxu0 0
        %926 = vmatpush1.bf16.msra.mxu0 0
        %927 = vmatprep.subr.bf16.mxu0 0
        %928 = vmatpush1.bf16.msra.mxu0 0
        %929 = vmatprep.subr.bf16.mxu0 0
        %930 = vmatpush1.bf16.msra.mxu0 0
        %931 = vmatprep.subr.bf16.mxu0 0
        %932 = vmatpush1.bf16.msra.mxu0 0
        %933 = vmatprep.subr.bf16.mxu0 0
        %934 = vmatpush1.bf16.msra.mxu0 0
        %935 = vmatprep.subr.bf16.mxu0 0
        %936 = vmatpush1.bf16.msra.mxu0 0
        %937 = vmatprep.subr.bf16.mxu0 0
        %938 = vmatpush1.bf16.msra.mxu0 0
        %939 = vmatprep.subr.bf16.mxu0 0
        %940 = vmatpush1.bf16.msra.mxu0 0
        %941 = vmatprep.subr.bf16.mxu0 0
        %942 = vmatpush1.bf16.msra.mxu0 0
        %943 = vmatprep.subr.bf16.mxu0 0
        %944 = vmatpush1.bf16.msra.mxu0 0
        %945 = vmatprep.mubr.bf16.mxu0 0
        %946 = vmatmul.mubr.bf16.gmra.mrb[0].mxu0 %v863
        %v947 = vpop.f32.mrb[0].mxu0
        %v948 = vadd.f32 0.0, %v947
        %v949 = vpop.f32.mrb[0].mxu0
        %v950 = vpop.f32.mrb[0].mxu0
        %v951 = vpop.f32.mrb[0].mxu0
        %952 = vdwg.mxu0
        %v953 = vpack.c.bf16 %v948, %v948
        %954 = vst [vmem:[%s485 + $0x2] sm:$0x3] %v953
        %v956 = vsel %vm659, %v861, 0
        %958 = vmatprep.subr.bf16.mxu0 0
        %959 = vmatpush1.bf16.msra.mxu0 %v956
        %960 = vmatprep.subr.bf16.mxu0 0
        %961 = vmatpush1.bf16.msra.mxu0 0
        %962 = vmatprep.subr.bf16.mxu0 0
        %963 = vmatpush1.bf16.msra.mxu0 0
        %964 = vmatprep.subr.bf16.mxu0 0
        %965 = vmatpush1.bf16.msra.mxu0 0
        %966 = vmatprep.subr.bf16.mxu0 0
        %967 = vmatpush1.bf16.msra.mxu0 0
        %968 = vmatprep.subr.bf16.mxu0 0
        %969 = vmatpush1.bf16.msra.mxu0 0
        %970 = vmatprep.subr.bf16.mxu0 0
        %971 = vmatpush1.bf16.msra.mxu0 0
        %972 = vmatprep.subr.bf16.mxu0 0
        %973 = vmatpush1.bf16.msra.mxu0 0
        %974 = vmatprep.subr.bf16.mxu0 0
        %975 = vmatpush1.bf16.msra.mxu0 0
        %976 = vmatprep.subr.bf16.mxu0 0
        %977 = vmatpush1.bf16.msra.mxu0 0
        %978 = vmatprep.subr.bf16.mxu0 0
        %979 = vmatpush1.bf16.msra.mxu0 0
        %980 = vmatprep.subr.bf16.mxu0 0
        %981 = vmatpush1.bf16.msra.mxu0 0
        %982 = vmatprep.subr.bf16.mxu0 0
        %983 = vmatpush1.bf16.msra.mxu0 0
        %984 = vmatprep.subr.bf16.mxu0 0
        %985 = vmatpush1.bf16.msra.mxu0 0
        %986 = vmatprep.subr.bf16.mxu0 0
        %987 = vmatpush1.bf16.msra.mxu0 0
        %988 = vmatprep.subr.bf16.mxu0 0
        %989 = vmatpush1.bf16.msra.mxu0 0
        %990 = vmatprep.mubr.bf16.mxu0 0
        %991 = vmatmul.mubr.bf16.gmra.mrb[0].mxu0 %v863
        %v992 = vpop.f32.mrb[0].mxu0
        %v993 = vadd.f32 0.0, %v992
        %v994 = vpop.f32.mrb[0].mxu0
        %v995 = vpop.f32.mrb[0].mxu0
        %v996 = vpop.f32.mrb[0].mxu0
        %997 = vdwg.mxu0
        %v998 = vpack.c.bf16 %v993, %v993
        %999 = vst [vmem:[%s485 + $0x4] sm:$0x3] %v998
        %s1000 = sand.u32 %s229, 1
        %s1001 = scalar_lea.sflag [#allocation4], %s1000
        %s1002 = sand.u32 %s229, 1
        %s1003 = smul.addr %s1002, 6
        %s1004 = scalar_lea.vmem [#allocation16], %s1003
        // Predicated region
        $region85: #{tpu_custom_call.1} parent=51 // pred_check
          %p1005 = pneg %p239
        $region86: #{tpu_custom_call.1} parent=51 // pred_check_branch
          %1007 = sbr.rel (%p1005) target = $region88
        $region87: #{tpu_custom_call.1} parent=51 // pred_region
          %s1009 = ssub.s32 96, 96
          %1010 = vsyncadd %s1001, %s1009
          %s1011 = smul.addr %s33, 3
          %s1012 = smul.addr %s1011, 32
          %s1013 = scalar_lea.hbm %s8, %s1012
          %s1015 = sshll.u32 %s1004, 4
          %s1016 = int_to_ptr.vmem [resolvable:$true] %s1015
          %1018 = dma.vmem_to_hbm [thread:$0]  %s1016, 96, %s1013, %s1001
        $region88: #{tpu_custom_call.1} parent=51 // pred_fallthru
          _
      $region52: #{tpu_custom_call.1} parent=5 // pred_fallthru
        _
      %p1019 = scmp.le.s32.totalorder 2, %s28
      // Predicated region
      $region89: #{tpu_custom_call.1} parent=5 // pred_check
        %p1020 = pneg %p1019
      $region90: #{tpu_custom_call.1} parent=5 // pred_check_branch
        %1022 = sbr.rel (%p1020) target = $region92
      $region91: #{tpu_custom_call.1} parent=5 // pred_region
        %s1023 = ssub.s32 %s28, 2
        // Predicated region
        $region93: #{tpu_custom_call.1} parent=91 // pred_check
          %p1024 = pneg %p245
        $region94: #{tpu_custom_call.1} parent=91 // pred_check_branch
          %1026 = sbr.rel (%p1024) target = $region96
        $region95: #{tpu_custom_call.1} parent=91 // pred_region
          %s1027 = sand.u32 %s230, 1
          %s1028 = scalar_lea.sflag [#allocation4], %s1027
          %s1029 = sand.u32 %s230, 1
          %s1030 = smul.addr %s1029, 6
          %s1031 = scalar_lea.vmem [#allocation16], %s1030
          %1032 = dma.done %s1028, 96
        $region96: #{tpu_custom_call.1} parent=91 // pred_fallthru
          _
      $region92: #{tpu_custom_call.1} parent=5 // pred_fallthru
        _
    $region6: #{tpu_custom_call.1} parent=1 // loop_footer
      %s32 = sadd.s32 1, %s28
    $region7: #{tpu_custom_call.1} parent=1 // loop_footer_branch
      %27 = sbr.rel target = $region3
    $region8: #{tpu_custom_call.1} parent=1 // loop_exit
      _
    %1033 = vsyncpa [#allocation3], 1
    %s1034 = scalar_lea.sflag [#allocation3], 1
    %1035 = vsyncpa %s1034, 1
    %1036 = vsyncpa [#allocation6], 1
    %s1037 = scalar_lea.sflag [#allocation6], 1
    %1038 = vsyncpa %s1037, 1
    %1039 = vsyncpa [#allocation9], 1
    %s1040 = scalar_lea.sflag [#allocation9], 1
    %1041 = vsyncpa %s1040, 1
    %1042 = vsyncpa [#allocation12], 1
    %1043 = vsyncpa [#allocation15], 1
    %1044 = vsyncpa [#allocation4], 1
    %s1045 = scalar_lea.sflag [#allocation4], 1
    %1046 = vsyncpa %s1045, 1

</llo_original>
